<compile_context>
chip_gen: v5e
topology: v5e:2x2
jax: 0.10.0
libtpu: 0.0.40
codegen_flags: <defaults>
</compile_context>

<pallas_src>
import jax
import jax.numpy as jnp
from jax import lax
from jax.experimental import pallas as pl
from jax.experimental.pallas import tpu as pltpu

TARGET_TOKEN_ID = 7081   # exact index from the PyTorch module
VOCAB = 7168             # >= 7082, multiple of 128
HIDDEN = 32
SUBLANES = 8             # pad batch rows to a full sublane group
OUT_LANES = 128          # lane-dense output slab width


def prm_head_kernel(h_ref, w_ref, o_ref):
    """Single-step kernel: full-vocab matmul + softmax + target-column gather.

    h_ref: (Bp, H)   bf16 last-position hidden states (batch padded to 8)
    w_ref: (H, V)    bf16 LM-head weight (entire vocab, VMEM resident)
    o_ref: (Bp, 128) f32  probability at TARGET_TOKEN_ID, broadcast over lanes
    """
    # logits: (Bp, V), bf16 MXU inputs, f32 accumulation.
    s = jnp.dot(h_ref[...], w_ref[...], preferred_element_type=jnp.float32)

    m = jnp.max(s, axis=-1, keepdims=True)                       # (Bp, 1)
    p = jnp.exp(s - m)                                           # (Bp, V)
    l = jnp.sum(p, axis=-1, keepdims=True)                       # (Bp, 1)

    # Gather the target column via a masked row-reduction (TPU-friendly, runs once).
    col_ids = lax.broadcasted_iota(jnp.int32, s.shape, 1)
    t = jnp.sum(jnp.where(col_ids == TARGET_TOKEN_ID, p, 0.0),
                axis=-1, keepdims=True)                          # (Bp, 1)

    prob = t * pl.reciprocal(l, approx=False)                    # (Bp, 1)
    # Lane-dense store (avoids masked vst on a width-1 output).
    o_ref[...] = jnp.broadcast_to(prob, o_ref.shape)


def prm_head(h_last, w_lm):
    """softmax(h_last @ w_lm, axis=-1)[:, TARGET_TOKEN_ID] via Pallas."""
    B, H = h_last.shape
    V = w_lm.shape[1]
    Bp = max(SUBLANES, ((B + SUBLANES - 1) // SUBLANES) * SUBLANES)

    # bf16 MXU inputs; pad batch rows with zeros (sliced away after the call).
    h_pad = jnp.zeros((Bp, H), jnp.bfloat16).at[:B].set(
        h_last.astype(jnp.bfloat16))
    w_bf16 = w_lm.astype(jnp.bfloat16)

    out = pl.pallas_call(
        prm_head_kernel,
        out_shape=jax.ShapeDtypeStruct((Bp, OUT_LANES), jnp.float32),
        grid=(1,),
        in_specs=[
            pl.BlockSpec((Bp, H), lambda i: (0, 0)),
            pl.BlockSpec((H, V), lambda i: (0, 0)),
        ],
        out_specs=pl.BlockSpec((Bp, OUT_LANES), lambda i: (0, 0)),
        compiler_params=pltpu.CompilerParams(
            dimension_semantics=("arbitrary",)),
    )(h_pad, w_bf16)
    return out[:B, 0]                                            # (B,)


def base_model_last_hidden(input_ids, attention_mask, embed_table):
    """Synthetic deterministic 'base model': embedding + mask-weighted pooling.

    Produces the hidden state of the last sequence position, [B, H].
    (Plain-JAX glue; the vocab-sized hot path is in the Pallas kernel.)
    """
    # TODO(synk): the real Qwen2 transformer base model is not reproduced here;
    # this stand-in only provides a deterministic last-position hidden state.
    emb = embed_table[input_ids]                              # (B, S, H)
    mask = attention_mask.astype(jnp.float32)[..., None]      # (B, S, 1)
    h_last = (emb * mask).sum(axis=1) / jnp.maximum(mask.sum(axis=1), 1.0)
    return h_last.astype(jnp.float32)                         # (B, H)


def qwen_prm_forward(input_ids, attention_mask, params):
    h_last = base_model_last_hidden(input_ids, attention_mask,
                                    params["embed_table"])
    return prm_head(h_last, params["w_lm"])                   # (B,)


if __name__ == "__main__":
    B, S = 2, 8
    key = jax.random.PRNGKey(0)
    k_emb, k_lm, k_ids, k_mask = jax.random.split(key, 4)

    params = {
        "embed_table": 0.05 * jax.random.normal(k_emb, (VOCAB, HIDDEN),
                                                dtype=jnp.float32),
        "w_lm": 0.05 * jax.random.normal(k_lm, (HIDDEN, VOCAB),
                                         dtype=jnp.float32),
    }

    input_ids = jax.random.randint(k_ids, (B, S), 0, VOCAB, dtype=jnp.int32)
    attention_mask = jnp.ones((B, S), dtype=jnp.int32).at[:, 0].set(
        jax.random.randint(k_mask, (B,), 0, 2, dtype=jnp.int32))

    out = jax.block_until_ready(
        qwen_prm_forward(input_ids, attention_mask, params))

    # Pure-JAX reference with the same bf16 matmul inputs / f32 accumulation.
    h_last = base_model_last_hidden(input_ids, attention_mask,
                                    params["embed_table"])
    logits_ref = jnp.dot(h_last.astype(jnp.bfloat16),
                         params["w_lm"].astype(jnp.bfloat16),
                         preferred_element_type=jnp.float32)      # (B, V)
    ref = jax.nn.softmax(logits_ref, axis=-1)[:, TARGET_TOKEN_ID]  # (B,)

    # Full-precision reference as a looser sanity check of the bf16 cast.
    ref_f32 = jax.nn.softmax(h_last @ params["w_lm"],
                             axis=-1)[:, TARGET_TOKEN_ID]

    assert out.shape == (B,)
    assert jnp.allclose(out, ref, rtol=1e-3, atol=1e-6), (out, ref)
    assert jnp.allclose(out, ref_f32, rtol=2e-2, atol=1e-5), (out, ref_f32)
    print("KERNEL_OK")
</pallas_src>

<mosaic_0001>
module attributes {stable_mosaic.version = 11 : i64} {
  func.func @prm_head_kernel(%arg0: i32, %arg1: memref<8x32xbf16, #tpu.memory_space<vmem>>, %arg2: memref<32x7168xbf16, #tpu.memory_space<vmem>>, %arg3: memref<8x128xf32, #tpu.memory_space<vmem>>) attributes {dimension_semantics = [#tpu.dimension_semantics<arbitrary>], iteration_bounds = array<i64: 1>, scalar_prefetch = 0 : i64, scratch_operands = 0 : i64, tpu.core_type = #tpu.core_type<tc>, window_params = [{pipeline_mode = #tpu.pipeline_mode<synchronous>, transform_indices = @transform_0, window_bounds = array<i64: 8, 32>}, {pipeline_mode = #tpu.pipeline_mode<synchronous>, transform_indices = @transform_1, window_bounds = array<i64: 32, 7168>}, {pipeline_mode = #tpu.pipeline_mode<synchronous>, transform_indices = @transform_2, window_bounds = array<i64: 8, 128>}]} {
    %c0 = arith.constant 0 : index
    %c0_0 = arith.constant 0 : index
    %0 = vector.load %arg1[%c0, %c0_0] : memref<8x32xbf16, #tpu.memory_space<vmem>>, vector<8x32xbf16>
    %c0_1 = arith.constant 0 : index
    %c0_2 = arith.constant 0 : index
    %1 = vector.load %arg2[%c0_1, %c0_2] : memref<32x7168xbf16, #tpu.memory_space<vmem>>, vector<32x7168xbf16>
    %cst = arith.constant dense<0.000000e+00> : vector<8x7168xf32>
    %2 = tpu.matmul %0, %1, %cst {dimension_numbers = #tpu.dot_dimension_numbers<[1], [0], [0], [1], [0, 0, 1, 1], [], []>} : vector<8x32xbf16>, vector<32x7168xbf16>, vector<8x7168xf32> -> vector<8x7168xf32>
    %cst_3 = arith.constant dense<0xFF800000> : vector<8xf32>
    %3 = vector.multi_reduction <maximumf>, %2, %cst_3 [1] : vector<8x7168xf32> to vector<8xf32>
    %4 = vector.shape_cast %3 : vector<8xf32> to vector<8x1xf32>
    %5 = vector.broadcast %4 : vector<8x1xf32> to vector<8x7168xf32>
    %6 = arith.subf %2, %5 : vector<8x7168xf32>
    %7 = math.exp %6 : vector<8x7168xf32>
    %cst_4 = arith.constant dense<0.000000e+00> : vector<8xf32>
    %8 = vector.multi_reduction <add>, %7, %cst_4 [1] : vector<8x7168xf32> to vector<8xf32>
    %9 = vector.shape_cast %8 : vector<8xf32> to vector<8x1xf32>
    %10 = tpu.iota {dimensions = array<i32: 1>} : vector<8x7168xi32>
    %c7081_i32 = arith.constant 7081 : i32
    %11 = vector.broadcast %c7081_i32 : i32 to vector<8x7168xi32>
    %12 = arith.cmpi eq, %10, %11 : vector<8x7168xi32>
    %cst_5 = arith.constant 0.000000e+00 : f32
    %13 = vector.broadcast %cst_5 : f32 to vector<8x7168xf32>
    %14 = arith.select %12, %7, %13 : vector<8x7168xi1>, vector<8x7168xf32>
    %cst_6 = arith.constant dense<0.000000e+00> : vector<8xf32>
    %15 = vector.multi_reduction <add>, %14, %cst_6 [1] : vector<8x7168xf32> to vector<8xf32>
    %16 = vector.shape_cast %15 : vector<8xf32> to vector<8x1xf32>
    %17 = tpu.reciprocal %9 : vector<8x1xf32> -> vector<8x1xf32>
    %18 = arith.mulf %16, %17 : vector<8x1xf32>
    %19 = vector.shape_cast %18 : vector<8x1xf32> to vector<8x1xf32>
    %20 = vector.broadcast %19 : vector<8x1xf32> to vector<8x128xf32>
    %c0_7 = arith.constant 0 : index
    %c0_8 = arith.constant 0 : index
    %21 = vector.load %arg3[%c0_7, %c0_8] : memref<8x128xf32, #tpu.memory_space<vmem>>, vector<8x128xf32>
    tpu.vector_store %arg3[%c0_7, %c0_8], %20 {strides = array<i32>} : memref<8x128xf32, #tpu.memory_space<vmem>>, vector<8x128xf32>,
    return
  }
  func.func @transform_0(%arg0: i32) -> (i32, i32) {
    %c0_i32 = arith.constant 0 : i32
    %c0_i32_0 = arith.constant 0 : i32
    %c0_i32_1 = arith.constant 0 : i32
    return %c0_i32, %c0_i32_0 : i32, i32
  }
  func.func @transform_1(%arg0: i32) -> (i32, i32) {
    %c0_i32 = arith.constant 0 : i32
    %c0_i32_0 = arith.constant 0 : i32
    %c0_i32_1 = arith.constant 0 : i32
    return %c0_i32, %c0_i32_0 : i32, i32
  }
  func.func @transform_2(%arg0: i32) -> (i32, i32) {
    %c0_i32 = arith.constant 0 : i32
    %c0_i32_0 = arith.constant 0 : i32
    %c0_i32_1 = arith.constant 0 : i32
    return %c0_i32, %c0_i32_0 : i32, i32
  }
}

</mosaic_0001>

<llo_original>
// kernel: tpu_custom_call.1
$region0: #{tpu_custom_call.1}
  #allocation0 [shape = 'u32[]', space=smem, size = 0x4, offset = 0x4, fixed_abs, tag = 'smem constant byte address 0x4 - core index']
  #allocation1 [shape = 'u32[72,128]{1,0:T(1,128)}', space=vmem, size = 0x9000, scoped, tag = 'internal scratch']
  %s0 = inlined_call_operand.hbm [shape: bf16[8,32], index: 0, kind: input, shape index: {}]
  %s1 = inlined_call_operand.hbm [shape: bf16[32,7168], index: 1, kind: input, shape index: {}]
  %s2 = inlined_call_operand.hbm [shape: f32[8,128], index: 2, kind: output, shape index: {}]
  %s3 = sld [smem:[#allocation0]]
  $region26: #{tpu_custom_call.1} parent=0
    _
  %s5 = ssub.s32 1, %s3
  %s6 = scalar_select 0, %s5, %s3
  $region1: #{tpu_custom_call.1} parent=0
    #allocation2 [shape = 'u8[2048]{0}', space=vmem, size = 0x800, scoped, tag = 'input window, operand 0, single buffered']
    #allocation3 [shape = 's32[1]{0}', space=sflag, size = 0x4, scoped, tag = 'scoped memory for tpu_custom_call.1']
    #allocation4 [shape = 's32[1]{0}', space=sflag, size = 0x4, scoped, tag = 'scoped memory for tpu_custom_call.1']
    #allocation5 [shape = 'u8[458752]{0}', space=vmem, size = 0x70000, scoped, tag = 'input window, operand 1, single buffered']
    #allocation6 [shape = 's32[1]{0}', space=sflag, size = 0x4, scoped, tag = 'scoped memory for tpu_custom_call.1']
    #allocation7 [shape = 'u8[4096]{0}', space=vmem, size = 0x1000, scoped, tag = 'output window, operand 0, single buffered']
    %7 = vsyncpa [#allocation3], 0
    %8 = vsyncpa [#allocation6], 0
    %9 = vsyncpa [#allocation4], 0
    // Predicated region
    $region2: #{tpu_custom_call.1} parent=1 // pred_check
      _
    $region3: #{tpu_custom_call.1} parent=1 // pred_check_branch
      %11 = sbr.rel (0) target = $region5
    $region4: #{tpu_custom_call.1} parent=1 // pred_region
      %13 = vsyncadd [#allocation3], 0
      %s15 = sshll.u32 %s0, 4
      %s16 = int_to_ptr.hbm [resolvable:$true] %s15
      %s17 = sshll.u32 [#allocation2], 4
      %s18 = int_to_ptr.vmem [resolvable:$true] %s17
      %20 = dma.hbm_to_vmem [thread:$0]  %s16, 64, %s18, [#allocation3]
    $region5: #{tpu_custom_call.1} parent=1 // pred_fallthru
      _
    // Predicated region
    $region6: #{tpu_custom_call.1} parent=1 // pred_check
      _
    $region7: #{tpu_custom_call.1} parent=1 // pred_check_branch
      %22 = sbr.rel (0) target = $region9
    $region8: #{tpu_custom_call.1} parent=1 // pred_region
      %24 = vsyncadd [#allocation6], 0
      %s25 = sshll.u32 %s1, 4
      %s26 = int_to_ptr.hbm [resolvable:$true] %s25
      %s27 = sshll.u32 [#allocation5], 4
      %s28 = int_to_ptr.vmem [resolvable:$true] %s27
      %33 = dma.hbm_to_vmem [thread:$0]  %s26, 14336, %s28, [#allocation6], 3584, 3584, 224
    $region9: #{tpu_custom_call.1} parent=1 // pred_fallthru
      _
    // Predicated region
    $region10: #{tpu_custom_call.1} parent=1 // pred_check
      _
    $region11: #{tpu_custom_call.1} parent=1 // pred_check_branch
      %35 = sbr.rel (0) target = $region13
    $region12: #{tpu_custom_call.1} parent=1 // pred_region
      %37 = dma.done [#allocation3], 64
    $region13: #{tpu_custom_call.1} parent=1 // pred_fallthru
      _
    // Predicated region
    $region14: #{tpu_custom_call.1} parent=1 // pred_check
      _
    $region15: #{tpu_custom_call.1} parent=1 // pred_check_branch
      %39 = sbr.rel (0) target = $region17
    $region16: #{tpu_custom_call.1} parent=1 // pred_region
      %41 = dma.done [#allocation6], 14336
    $region17: #{tpu_custom_call.1} parent=1 // pred_fallthru
      _
    %v43 = vld [vmem:[#allocation2] sm:$0xf]
    %v44 = vld [vmem:[#allocation5] sm:$0xff]
    %v45 = vld [vmem:[#allocation5 + $0x8] sm:$0xff]
    %v46 = vld [vmem:[#allocation5 + $0x10] sm:$0xff]
    %v47 = vld [vmem:[#allocation5 + $0x18] sm:$0xff]
    %v48 = vld [vmem:[#allocation5 + $0x20] sm:$0xff]
    %v49 = vld [vmem:[#allocation5 + $0x28] sm:$0xff]
    %v50 = vld [vmem:[#allocation5 + $0x30] sm:$0xff]
    %v51 = vld [vmem:[#allocation5 + $0x38] sm:$0xff]
    %v52 = vld [vmem:[#allocation5 + $0x40] sm:$0xff]
    %v53 = vld [vmem:[#allocation5 + $0x48] sm:$0xff]
    %v54 = vld [vmem:[#allocation5 + $0x50] sm:$0xff]
    %v55 = vld [vmem:[#allocation5 + $0x58] sm:$0xff]
    %v56 = vld [vmem:[#allocation5 + $0x60] sm:$0xff]
    %v57 = vld [vmem:[#allocation5 + $0x68] sm:$0xff]
    %v58 = vld [vmem:[#allocation5 + $0x70] sm:$0xff]
    %v59 = vld [vmem:[#allocation5 + $0x78] sm:$0xff]
    %v60 = vld [vmem:[#allocation5 + $0x80] sm:$0xff]
    %v61 = vld [vmem:[#allocation5 + $0x88] sm:$0xff]
    %v62 = vld [vmem:[#allocation5 + $0x90] sm:$0xff]
    %v63 = vld [vmem:[#allocation5 + $0x98] sm:$0xff]
    %v64 = vld [vmem:[#allocation5 + $0xa0] sm:$0xff]
    %v65 = vld [vmem:[#allocation5 + $0xa8] sm:$0xff]
    %v66 = vld [vmem:[#allocation5 + $0xb0] sm:$0xff]
    %v67 = vld [vmem:[#allocation5 + $0xb8] sm:$0xff]
    %v68 = vld [vmem:[#allocation5 + $0xc0] sm:$0xff]
    %v69 = vld [vmem:[#allocation5 + $0xc8] sm:$0xff]
    %v70 = vld [vmem:[#allocation5 + $0xd0] sm:$0xff]
    %v71 = vld [vmem:[#allocation5 + $0xd8] sm:$0xff]
    %v72 = vld [vmem:[#allocation5 + $0xe0] sm:$0xff]
    %v73 = vld [vmem:[#allocation5 + $0xe8] sm:$0xff]
    %v74 = vld [vmem:[#allocation5 + $0xf0] sm:$0xff]
    %v75 = vld [vmem:[#allocation5 + $0xf8] sm:$0xff]
    %v76 = vld [vmem:[#allocation5 + $0x100] sm:$0xff]
    %v77 = vld [vmem:[#allocation5 + $0x108] sm:$0xff]
    %v78 = vld [vmem:[#allocation5 + $0x110] sm:$0xff]
    %v79 = vld [vmem:[#allocation5 + $0x118] sm:$0xff]
    %v80 = vld [vmem:[#allocation5 + $0x120] sm:$0xff]
    %v81 = vld [vmem:[#allocation5 + $0x128] sm:$0xff]
    %v82 = vld [vmem:[#allocation5 + $0x130] sm:$0xff]
    %v83 = vld [vmem:[#allocation5 + $0x138] sm:$0xff]
    %v84 = vld [vmem:[#allocation5 + $0x140] sm:$0xff]
    %v85 = vld [vmem:[#allocation5 + $0x148] sm:$0xff]
    %v86 = vld [vmem:[#allocation5 + $0x150] sm:$0xff]
    %v87 = vld [vmem:[#allocation5 + $0x158] sm:$0xff]
    %v88 = vld [vmem:[#allocation5 + $0x160] sm:$0xff]
    %v89 = vld [vmem:[#allocation5 + $0x168] sm:$0xff]
    %v90 = vld [vmem:[#allocation5 + $0x170] sm:$0xff]
    %v91 = vld [vmem:[#allocation5 + $0x178] sm:$0xff]
    %v92 = vld [vmem:[#allocation5 + $0x180] sm:$0xff]
    %v93 = vld [vmem:[#allocation5 + $0x188] sm:$0xff]
    %v94 = vld [vmem:[#allocation5 + $0x190] sm:$0xff]
    %v95 = vld [vmem:[#allocation5 + $0x198] sm:$0xff]
    %v96 = vld [vmem:[#allocation5 + $0x1a0] sm:$0xff]
    %v97 = vld [vmem:[#allocation5 + $0x1a8] sm:$0xff]
    %v98 = vld [vmem:[#allocation5 + $0x1b0] sm:$0xff]
    %v99 = vld [vmem:[#allocation5 + $0x1b8] sm:$0xff]
    %v100 = vld [vmem:[#allocation5 + $0x1c0] sm:$0xff]
    %v101 = vld [vmem:[#allocation5 + $0x1c8] sm:$0xff]
    %v102 = vld [vmem:[#allocation5 + $0x1d0] sm:$0xff]
    %v103 = vld [vmem:[#allocation5 + $0x1d8] sm:$0xff]
    %v104 = vld [vmem:[#allocation5 + $0x1e0] sm:$0xff]
    %v105 = vld [vmem:[#allocation5 + $0x1e8] sm:$0xff]
    %v106 = vld [vmem:[#allocation5 + $0x1f0] sm:$0xff]
    %v107 = vld [vmem:[#allocation5 + $0x1f8] sm:$0xff]
    %v108 = vld [vmem:[#allocation5 + $0x200] sm:$0xff]
    %v109 = vld [vmem:[#allocation5 + $0x208] sm:$0xff]
    %v110 = vld [vmem:[#allocation5 + $0x210] sm:$0xff]
    %v111 = vld [vmem:[#allocation5 + $0x218] sm:$0xff]
    %v112 = vld [vmem:[#allocation5 + $0x220] sm:$0xff]
    %v113 = vld [vmem:[#allocation5 + $0x228] sm:$0xff]
    %v114 = vld [vmem:[#allocation5 + $0x230] sm:$0xff]
    %v115 = vld [vmem:[#allocation5 + $0x238] sm:$0xff]
    %v116 = vld [vmem:[#allocation5 + $0x240] sm:$0xff]
    %v117 = vld [vmem:[#allocation5 + $0x248] sm:$0xff]
    %v118 = vld [vmem:[#allocation5 + $0x250] sm:$0xff]
    %v119 = vld [vmem:[#allocation5 + $0x258] sm:$0xff]
    %v120 = vld [vmem:[#allocation5 + $0x260] sm:$0xff]
    %v121 = vld [vmem:[#allocation5 + $0x268] sm:$0xff]
    %v122 = vld [vmem:[#allocation5 + $0x270] sm:$0xff]
    %v123 = vld [vmem:[#allocation5 + $0x278] sm:$0xff]
    %v124 = vld [vmem:[#allocation5 + $0x280] sm:$0xff]
    %v125 = vld [vmem:[#allocation5 + $0x288] sm:$0xff]
    %v126 = vld [vmem:[#allocation5 + $0x290] sm:$0xff]
    %v127 = vld [vmem:[#allocation5 + $0x298] sm:$0xff]
    %v128 = vld [vmem:[#allocation5 + $0x2a0] sm:$0xff]
    %v129 = vld [vmem:[#allocation5 + $0x2a8] sm:$0xff]
    %v130 = vld [vmem:[#allocation5 + $0x2b0] sm:$0xff]
    %v131 = vld [vmem:[#allocation5 + $0x2b8] sm:$0xff]
    %v132 = vld [vmem:[#allocation5 + $0x2c0] sm:$0xff]
    %v133 = vld [vmem:[#allocation5 + $0x2c8] sm:$0xff]
    %v134 = vld [vmem:[#allocation5 + $0x2d0] sm:$0xff]
    %v135 = vld [vmem:[#allocation5 + $0x2d8] sm:$0xff]
    %v136 = vld [vmem:[#allocation5 + $0x2e0] sm:$0xff]
    %v137 = vld [vmem:[#allocation5 + $0x2e8] sm:$0xff]
    %v138 = vld [vmem:[#allocation5 + $0x2f0] sm:$0xff]
    %v139 = vld [vmem:[#allocation5 + $0x2f8] sm:$0xff]
    %v140 = vld [vmem:[#allocation5 + $0x300] sm:$0xff]
    %v141 = vld [vmem:[#allocation5 + $0x308] sm:$0xff]
    %v142 = vld [vmem:[#allocation5 + $0x310] sm:$0xff]
    %v143 = vld [vmem:[#allocation5 + $0x318] sm:$0xff]
    %v144 = vld [vmem:[#allocation5 + $0x320] sm:$0xff]
    %v145 = vld [vmem:[#allocation5 + $0x328] sm:$0xff]
    %v146 = vld [vmem:[#allocation5 + $0x330] sm:$0xff]
    %v147 = vld [vmem:[#allocation5 + $0x338] sm:$0xff]
    %v148 = vld [vmem:[#allocation5 + $0x340] sm:$0xff]
    %v149 = vld [vmem:[#allocation5 + $0x348] sm:$0xff]
    %v150 = vld [vmem:[#allocation5 + $0x350] sm:$0xff]
    %v151 = vld [vmem:[#allocation5 + $0x358] sm:$0xff]
    %v152 = vld [vmem:[#allocation5 + $0x360] sm:$0xff]
    %v153 = vld [vmem:[#allocation5 + $0x368] sm:$0xff]
    %v154 = vld [vmem:[#allocation5 + $0x370] sm:$0xff]
    %v155 = vld [vmem:[#allocation5 + $0x378] sm:$0xff]
    %v268 = vunpack.c.l.b16 %v44
    %v269 = vunpack.c.h.b16 %v44
    %v270 = vunpack.c.l.b16 %v45
    %v271 = vunpack.c.h.b16 %v45
    %v272 = vunpack.c.l.b16 %v46
    %v273 = vunpack.c.h.b16 %v46
    %v274 = vunpack.c.l.b16 %v47
    %v275 = vunpack.c.h.b16 %v47
    %v276 = vunpack.c.l.b16 %v48
    %v277 = vunpack.c.h.b16 %v48
    %v278 = vunpack.c.l.b16 %v49
    %v279 = vunpack.c.h.b16 %v49
    %v280 = vunpack.c.l.b16 %v50
    %v281 = vunpack.c.h.b16 %v50
    %v282 = vunpack.c.l.b16 %v51
    %v283 = vunpack.c.h.b16 %v51
    %v284 = vunpack.c.l.b16 %v52
    %v285 = vunpack.c.h.b16 %v52
    %v286 = vunpack.c.l.b16 %v53
    %v287 = vunpack.c.h.b16 %v53
    %v288 = vunpack.c.l.b16 %v54
    %v289 = vunpack.c.h.b16 %v54
    %v290 = vunpack.c.l.b16 %v55
    %v291 = vunpack.c.h.b16 %v55
    %v292 = vunpack.c.l.b16 %v56
    %v293 = vunpack.c.h.b16 %v56
    %v294 = vunpack.c.l.b16 %v57
    %v295 = vunpack.c.h.b16 %v57
    %v296 = vunpack.c.l.b16 %v58
    %v297 = vunpack.c.h.b16 %v58
    %v298 = vunpack.c.l.b16 %v59
    %v299 = vunpack.c.h.b16 %v59
    %v300 = vunpack.c.l.b16 %v60
    %v301 = vunpack.c.h.b16 %v60
    %v302 = vunpack.c.l.b16 %v61
    %v303 = vunpack.c.h.b16 %v61
    %v304 = vunpack.c.l.b16 %v62
    %v305 = vunpack.c.h.b16 %v62
    %v306 = vunpack.c.l.b16 %v63
    %v307 = vunpack.c.h.b16 %v63
    %v308 = vunpack.c.l.b16 %v64
    %v309 = vunpack.c.h.b16 %v64
    %v310 = vunpack.c.l.b16 %v65
    %v311 = vunpack.c.h.b16 %v65
    %v312 = vunpack.c.l.b16 %v66
    %v313 = vunpack.c.h.b16 %v66
    %v314 = vunpack.c.l.b16 %v67
    %v315 = vunpack.c.h.b16 %v67
    %v316 = vunpack.c.l.b16 %v68
    %v317 = vunpack.c.h.b16 %v68
    %v318 = vunpack.c.l.b16 %v69
    %v319 = vunpack.c.h.b16 %v69
    %v320 = vunpack.c.l.b16 %v70
    %v321 = vunpack.c.h.b16 %v70
    %v322 = vunpack.c.l.b16 %v71
    %v323 = vunpack.c.h.b16 %v71
    %v324 = vunpack.c.l.b16 %v72
    %v325 = vunpack.c.h.b16 %v72
    %v326 = vunpack.c.l.b16 %v73
    %v327 = vunpack.c.h.b16 %v73
    %v328 = vunpack.c.l.b16 %v74
    %v329 = vunpack.c.h.b16 %v74
    %v330 = vunpack.c.l.b16 %v75
    %v331 = vunpack.c.h.b16 %v75
    %v332 = vunpack.c.l.b16 %v76
    %v333 = vunpack.c.h.b16 %v76
    %v334 = vunpack.c.l.b16 %v77
    %v335 = vunpack.c.h.b16 %v77
    %v336 = vunpack.c.l.b16 %v78
    %v337 = vunpack.c.h.b16 %v78
    %v338 = vunpack.c.l.b16 %v79
    %v339 = vunpack.c.h.b16 %v79
    %v340 = vunpack.c.l.b16 %v80
    %v341 = vunpack.c.h.b16 %v80
    %v342 = vunpack.c.l.b16 %v81
    %v343 = vunpack.c.h.b16 %v81
    %v344 = vunpack.c.l.b16 %v82
    %v345 = vunpack.c.h.b16 %v82
    %v346 = vunpack.c.l.b16 %v83
    %v347 = vunpack.c.h.b16 %v83
    %v348 = vunpack.c.l.b16 %v84
    %v349 = vunpack.c.h.b16 %v84
    %v350 = vunpack.c.l.b16 %v85
    %v351 = vunpack.c.h.b16 %v85
    %v352 = vunpack.c.l.b16 %v86
    %v353 = vunpack.c.h.b16 %v86
    %v354 = vunpack.c.l.b16 %v87
    %v355 = vunpack.c.h.b16 %v87
    %v356 = vunpack.c.l.b16 %v88
    %v357 = vunpack.c.h.b16 %v88
    %v358 = vunpack.c.l.b16 %v89
    %v359 = vunpack.c.h.b16 %v89
    %v360 = vunpack.c.l.b16 %v90
    %v361 = vunpack.c.h.b16 %v90
    %v362 = vunpack.c.l.b16 %v91
    %v363 = vunpack.c.h.b16 %v91
    %v364 = vunpack.c.l.b16 %v92
    %v365 = vunpack.c.h.b16 %v92
    %v366 = vunpack.c.l.b16 %v93
    %v367 = vunpack.c.h.b16 %v93
    %v368 = vunpack.c.l.b16 %v94
    %v369 = vunpack.c.h.b16 %v94
    %v370 = vunpack.c.l.b16 %v95
    %v371 = vunpack.c.h.b16 %v95
    %v372 = vunpack.c.l.b16 %v96
    %v373 = vunpack.c.h.b16 %v96
    %v374 = vunpack.c.l.b16 %v97
    %v375 = vunpack.c.h.b16 %v97
    %v376 = vunpack.c.l.b16 %v98
    %v377 = vunpack.c.h.b16 %v98
    %v378 = vunpack.c.l.b16 %v99
    %v379 = vunpack.c.h.b16 %v99
    %v380 = vunpack.c.l.b16 %v100
    %v381 = vunpack.c.h.b16 %v100
    %v382 = vunpack.c.l.b16 %v101
    %v383 = vunpack.c.h.b16 %v101
    %v384 = vunpack.c.l.b16 %v102
    %v385 = vunpack.c.h.b16 %v102
    %v386 = vunpack.c.l.b16 %v103
    %v387 = vunpack.c.h.b16 %v103
    %v388 = vunpack.c.l.b16 %v104
    %v389 = vunpack.c.h.b16 %v104
    %v390 = vunpack.c.l.b16 %v105
    %v391 = vunpack.c.h.b16 %v105
    %v392 = vunpack.c.l.b16 %v106
    %v393 = vunpack.c.h.b16 %v106
    %v394 = vunpack.c.l.b16 %v107
    %v395 = vunpack.c.h.b16 %v107
    %v396 = vunpack.c.l.b16 %v108
    %v397 = vunpack.c.h.b16 %v108
    %v398 = vunpack.c.l.b16 %v109
    %v399 = vunpack.c.h.b16 %v109
    %v400 = vunpack.c.l.b16 %v110
    %v401 = vunpack.c.h.b16 %v110
    %v402 = vunpack.c.l.b16 %v111
    %v403 = vunpack.c.h.b16 %v111
    %v404 = vunpack.c.l.b16 %v112
    %v405 = vunpack.c.h.b16 %v112
    %v406 = vunpack.c.l.b16 %v113
    %v407 = vunpack.c.h.b16 %v113
    %v408 = vunpack.c.l.b16 %v114
    %v409 = vunpack.c.h.b16 %v114
    %v410 = vunpack.c.l.b16 %v115
    %v411 = vunpack.c.h.b16 %v115
    %v412 = vunpack.c.l.b16 %v116
    %v413 = vunpack.c.h.b16 %v116
    %v414 = vunpack.c.l.b16 %v117
    %v415 = vunpack.c.h.b16 %v117
    %v416 = vunpack.c.l.b16 %v118
    %v417 = vunpack.c.h.b16 %v118
    %v418 = vunpack.c.l.b16 %v119
    %v419 = vunpack.c.h.b16 %v119
    %v420 = vunpack.c.l.b16 %v120
    %v421 = vunpack.c.h.b16 %v120
    %v422 = vunpack.c.l.b16 %v121
    %v423 = vunpack.c.h.b16 %v121
    %v424 = vunpack.c.l.b16 %v122
    %v425 = vunpack.c.h.b16 %v122
    %v426 = vunpack.c.l.b16 %v123
    %v427 = vunpack.c.h.b16 %v123
    %v428 = vunpack.c.l.b16 %v124
    %v429 = vunpack.c.h.b16 %v124
    %v430 = vunpack.c.l.b16 %v125
    %v431 = vunpack.c.h.b16 %v125
    %v432 = vunpack.c.l.b16 %v126
    %v433 = vunpack.c.h.b16 %v126
    %v434 = vunpack.c.l.b16 %v127
    %v435 = vunpack.c.h.b16 %v127
    %v436 = vunpack.c.l.b16 %v128
    %v437 = vunpack.c.h.b16 %v128
    %v438 = vunpack.c.l.b16 %v129
    %v439 = vunpack.c.h.b16 %v129
    %v440 = vunpack.c.l.b16 %v130
    %v441 = vunpack.c.h.b16 %v130
    %v442 = vunpack.c.l.b16 %v131
    %v443 = vunpack.c.h.b16 %v131
    %v444 = vunpack.c.l.b16 %v132
    %v445 = vunpack.c.h.b16 %v132
    %v446 = vunpack.c.l.b16 %v133
    %v447 = vunpack.c.h.b16 %v133
    %v448 = vunpack.c.l.b16 %v134
    %v449 = vunpack.c.h.b16 %v134
    %v450 = vunpack.c.l.b16 %v135
    %v451 = vunpack.c.h.b16 %v135
    %v452 = vunpack.c.l.b16 %v136
    %v453 = vunpack.c.h.b16 %v136
    %v454 = vunpack.c.l.b16 %v137
    %v455 = vunpack.c.h.b16 %v137
    %v456 = vunpack.c.l.b16 %v138
    %v457 = vunpack.c.h.b16 %v138
    %v458 = vunpack.c.l.b16 %v139
    %v459 = vunpack.c.h.b16 %v139
    %v460 = vunpack.c.l.b16 %v140
    %v461 = vunpack.c.h.b16 %v140
    %v462 = vunpack.c.l.b16 %v141
    %v463 = vunpack.c.h.b16 %v141
    %v464 = vunpack.c.l.b16 %v142
    %v465 = vunpack.c.h.b16 %v142
    %v466 = vunpack.c.l.b16 %v143
    %v467 = vunpack.c.h.b16 %v143
    %v468 = vunpack.c.l.b16 %v144
    %v469 = vunpack.c.h.b16 %v144
    %v470 = vunpack.c.l.b16 %v145
    %v471 = vunpack.c.h.b16 %v145
    %v472 = vunpack.c.l.b16 %v146
    %v473 = vunpack.c.h.b16 %v146
    %v474 = vunpack.c.l.b16 %v147
    %v475 = vunpack.c.h.b16 %v147
    %v476 = vunpack.c.l.b16 %v148
    %v477 = vunpack.c.h.b16 %v148
    %v478 = vunpack.c.l.b16 %v149
    %v479 = vunpack.c.h.b16 %v149
    %v480 = vunpack.c.l.b16 %v150
    %v481 = vunpack.c.h.b16 %v150
    %v482 = vunpack.c.l.b16 %v151
    %v483 = vunpack.c.h.b16 %v151
    %v484 = vunpack.c.l.b16 %v152
    %v485 = vunpack.c.h.b16 %v152
    %v486 = vunpack.c.l.b16 %v153
    %v487 = vunpack.c.h.b16 %v153
    %v488 = vunpack.c.l.b16 %v154
    %v489 = vunpack.c.h.b16 %v154
    %v490 = vunpack.c.l.b16 %v155
    %v491 = vunpack.c.h.b16 %v155
    %v492 = vpack.c.b16 %v324, %v268
    %v493 = vpack.c.b16 %v325, %v269
    %v494 = vpack.c.b16 %v326, %v270
    %v495 = vpack.c.b16 %v327, %v271
    %v496 = vpack.c.b16 %v328, %v272
    %v497 = vpack.c.b16 %v329, %v273
    %v498 = vpack.c.b16 %v330, %v274
    %v499 = vpack.c.b16 %v331, %v275
    %v500 = vpack.c.b16 %v332, %v276
    %v501 = vpack.c.b16 %v333, %v277
    %v502 = vpack.c.b16 %v334, %v278
    %v503 = vpack.c.b16 %v335, %v279
    %v504 = vpack.c.b16 %v336, %v280
    %v505 = vpack.c.b16 %v337, %v281
    %v506 = vpack.c.b16 %v338, %v282
    %v507 = vpack.c.b16 %v339, %v283
    %v508 = vpack.c.b16 %v340, %v284
    %v509 = vpack.c.b16 %v341, %v285
    %v510 = vpack.c.b16 %v342, %v286
    %v511 = vpack.c.b16 %v343, %v287
    %v512 = vpack.c.b16 %v344, %v288
    %v513 = vpack.c.b16 %v345, %v289
    %v514 = vpack.c.b16 %v346, %v290
    %v515 = vpack.c.b16 %v347, %v291
    %v516 = vpack.c.b16 %v348, %v292
    %v517 = vpack.c.b16 %v349, %v293
    %v518 = vpack.c.b16 %v350, %v294
    %v519 = vpack.c.b16 %v351, %v295
    %v520 = vpack.c.b16 %v352, %v296
    %v521 = vpack.c.b16 %v353, %v297
    %v522 = vpack.c.b16 %v354, %v298
    %v523 = vpack.c.b16 %v355, %v299
    %v524 = vpack.c.b16 %v356, %v300
    %v525 = vpack.c.b16 %v357, %v301
    %v526 = vpack.c.b16 %v358, %v302
    %v527 = vpack.c.b16 %v359, %v303
    %v528 = vpack.c.b16 %v360, %v304
    %v529 = vpack.c.b16 %v361, %v305
    %v530 = vpack.c.b16 %v362, %v306
    %v531 = vpack.c.b16 %v363, %v307
    %v532 = vpack.c.b16 %v364, %v308
    %v533 = vpack.c.b16 %v365, %v309
    %v534 = vpack.c.b16 %v366, %v310
    %v535 = vpack.c.b16 %v367, %v311
    %v536 = vpack.c.b16 %v368, %v312
    %v537 = vpack.c.b16 %v369, %v313
    %v538 = vpack.c.b16 %v370, %v314
    %v539 = vpack.c.b16 %v371, %v315
    %v540 = vpack.c.b16 %v372, %v316
    %v541 = vpack.c.b16 %v373, %v317
    %v542 = vpack.c.b16 %v374, %v318
    %v543 = vpack.c.b16 %v375, %v319
    %v544 = vpack.c.b16 %v376, %v320
    %v545 = vpack.c.b16 %v377, %v321
    %v546 = vpack.c.b16 %v378, %v322
    %v547 = vpack.c.b16 %v379, %v323
    %v548 = vpack.c.b16 %v436, %v380
    %v549 = vpack.c.b16 %v437, %v381
    %v550 = vpack.c.b16 %v438, %v382
    %v551 = vpack.c.b16 %v439, %v383
    %v552 = vpack.c.b16 %v440, %v384
    %v553 = vpack.c.b16 %v441, %v385
    %v554 = vpack.c.b16 %v442, %v386
    %v555 = vpack.c.b16 %v443, %v387
    %v556 = vpack.c.b16 %v444, %v388
    %v557 = vpack.c.b16 %v445, %v389
    %v558 = vpack.c.b16 %v446, %v390
    %v559 = vpack.c.b16 %v447, %v391
    %v560 = vpack.c.b16 %v448, %v392
    %v561 = vpack.c.b16 %v449, %v393
    %v562 = vpack.c.b16 %v450, %v394
    %v563 = vpack.c.b16 %v451, %v395
    %v564 = vpack.c.b16 %v452, %v396
    %v565 = vpack.c.b16 %v453, %v397
    %v566 = vpack.c.b16 %v454, %v398
    %v567 = vpack.c.b16 %v455, %v399
    %v568 = vpack.c.b16 %v456, %v400
    %v569 = vpack.c.b16 %v457, %v401
    %v570 = vpack.c.b16 %v458, %v402
    %v571 = vpack.c.b16 %v459, %v403
    %v572 = vpack.c.b16 %v460, %v404
    %v573 = vpack.c.b16 %v461, %v405
    %v574 = vpack.c.b16 %v462, %v406
    %v575 = vpack.c.b16 %v463, %v407
    %v576 = vpack.c.b16 %v464, %v408
    %v577 = vpack.c.b16 %v465, %v409
    %v578 = vpack.c.b16 %v466, %v410
    %v579 = vpack.c.b16 %v467, %v411
    %v580 = vpack.c.b16 %v468, %v412
    %v581 = vpack.c.b16 %v469, %v413
    %v582 = vpack.c.b16 %v470, %v414
    %v583 = vpack.c.b16 %v471, %v415
    %v584 = vpack.c.b16 %v472, %v416
    %v585 = vpack.c.b16 %v473, %v417
    %v586 = vpack.c.b16 %v474, %v418
    %v587 = vpack.c.b16 %v475, %v419
    %v588 = vpack.c.b16 %v476, %v420
    %v589 = vpack.c.b16 %v477, %v421
    %v590 = vpack.c.b16 %v478, %v422
    %v591 = vpack.c.b16 %v479, %v423
    %v592 = vpack.c.b16 %v480, %v424
    %v593 = vpack.c.b16 %v481, %v425
    %v594 = vpack.c.b16 %v482, %v426
    %v595 = vpack.c.b16 %v483, %v427
    %v596 = vpack.c.b16 %v484, %v428
    %v597 = vpack.c.b16 %v485, %v429
    %v598 = vpack.c.b16 %v486, %v430
    %v599 = vpack.c.b16 %v487, %v431
    %v600 = vpack.c.b16 %v488, %v432
    %v601 = vpack.c.b16 %v489, %v433
    %v602 = vpack.c.b16 %v490, %v434
    %v603 = vpack.c.b16 %v491, %v435
    %vm716 = vcmask 261120
    %v718 = vsel %vm716, %v43, 0
    %720 = vmatpush.bf16.msra.mxu0 0
    %721 = vmatpush.bf16.msra.mxu0 0
    %722 = vmatpush.bf16.msra.mxu0 0
    %723 = vmatpush.bf16.msra.mxu0 0
    %724 = vmatpush.bf16.msra.mxu0 0
    %725 = vmatpush.bf16.msra.mxu0 0
    %726 = vmatpush.bf16.msra.mxu0 %v548
    %727 = vmatpush.bf16.msra.mxu0 %v492
    %728 = vmatmul.bf16.gmra.mxu0 %v718
    %v729 = vpop.f32.mrf.mxu0
    %v730 = vadd.f32 0.0, %v729
    %v731 = vpop.f32.mrf.mxu0
    %732 = vdwg.mxu0
    %733 = vmatpush.bf16.msra.mxu0 0
    %734 = vmatpush.bf16.msra.mxu0 0
    %735 = vmatpush.bf16.msra.mxu0 0
    %736 = vmatpush.bf16.msra.mxu0 0
    %737 = vmatpush.bf16.msra.mxu0 0
    %738 = vmatpush.bf16.msra.mxu0 0
    %739 = vmatpush.bf16.msra.mxu0 %v549
    %740 = vmatpush.bf16.msra.mxu0 %v493
    %741 = vmatmul.bf16.gmra.mxu0 %v718
    %v742 = vpop.f32.mrf.mxu0
    %v743 = vadd.f32 0.0, %v742
    %v744 = vpop.f32.mrf.mxu0
    %745 = vdwg.mxu0
    %746 = vmatpush.bf16.msra.mxu0 0
    %747 = vmatpush.bf16.msra.mxu0 0
    %748 = vmatpush.bf16.msra.mxu0 0
    %749 = vmatpush.bf16.msra.mxu0 0
    %750 = vmatpush.bf16.msra.mxu0 0
    %751 = vmatpush.bf16.msra.mxu0 0
    %752 = vmatpush.bf16.msra.mxu0 %v550
    %753 = vmatpush.bf16.msra.mxu0 %v494
    %754 = vmatmul.bf16.gmra.mxu0 %v718
    %v755 = vpop.f32.mrf.mxu0
    %v756 = vadd.f32 0.0, %v755
    %v757 = vpop.f32.mrf.mxu0
    %758 = vdwg.mxu0
    %759 = vmatpush.bf16.msra.mxu0 0
    %760 = vmatpush.bf16.msra.mxu0 0
    %761 = vmatpush.bf16.msra.mxu0 0
    %762 = vmatpush.bf16.msra.mxu0 0
    %763 = vmatpush.bf16.msra.mxu0 0
    %764 = vmatpush.bf16.msra.mxu0 0
    %765 = vmatpush.bf16.msra.mxu0 %v551
    %766 = vmatpush.bf16.msra.mxu0 %v495
    %767 = vmatmul.bf16.gmra.mxu0 %v718
    %v768 = vpop.f32.mrf.mxu0
    %v769 = vadd.f32 0.0, %v768
    %v770 = vpop.f32.mrf.mxu0
    %771 = vdwg.mxu0
    %772 = vmatpush.bf16.msra.mxu0 0
    %773 = vmatpush.bf16.msra.mxu0 0
    %774 = vmatpush.bf16.msra.mxu0 0
    %775 = vmatpush.bf16.msra.mxu0 0
    %776 = vmatpush.bf16.msra.mxu0 0
    %777 = vmatpush.bf16.msra.mxu0 0
    %778 = vmatpush.bf16.msra.mxu0 %v552
    %779 = vmatpush.bf16.msra.mxu0 %v496
    %780 = vmatmul.bf16.gmra.mxu0 %v718
    %v781 = vpop.f32.mrf.mxu0
    %v782 = vadd.f32 0.0, %v781
    %v783 = vpop.f32.mrf.mxu0
    %784 = vdwg.mxu0
    %785 = vmatpush.bf16.msra.mxu0 0
    %786 = vmatpush.bf16.msra.mxu0 0
    %787 = vmatpush.bf16.msra.mxu0 0
    %788 = vmatpush.bf16.msra.mxu0 0
    %789 = vmatpush.bf16.msra.mxu0 0
    %790 = vmatpush.bf16.msra.mxu0 0
    %791 = vmatpush.bf16.msra.mxu0 %v553
    %792 = vmatpush.bf16.msra.mxu0 %v497
    %793 = vmatmul.bf16.gmra.mxu0 %v718
    %v794 = vpop.f32.mrf.mxu0
    %v795 = vadd.f32 0.0, %v794
    %v796 = vpop.f32.mrf.mxu0
    %797 = vdwg.mxu0
    %798 = vmatpush.bf16.msra.mxu0 0
    %799 = vmatpush.bf16.msra.mxu0 0
    %800 = vmatpush.bf16.msra.mxu0 0
    %801 = vmatpush.bf16.msra.mxu0 0
    %802 = vmatpush.bf16.msra.mxu0 0
    %803 = vmatpush.bf16.msra.mxu0 0
    %804 = vmatpush.bf16.msra.mxu0 %v554
    %805 = vmatpush.bf16.msra.mxu0 %v498
    %806 = vmatmul.bf16.gmra.mxu0 %v718
    %v807 = vpop.f32.mrf.mxu0
    %v808 = vadd.f32 0.0, %v807
    %v809 = vpop.f32.mrf.mxu0
    %810 = vdwg.mxu0
    %811 = vmatpush.bf16.msra.mxu0 0
    %812 = vmatpush.bf16.msra.mxu0 0
    %813 = vmatpush.bf16.msra.mxu0 0
    %814 = vmatpush.bf16.msra.mxu0 0
    %815 = vmatpush.bf16.msra.mxu0 0
    %816 = vmatpush.bf16.msra.mxu0 0
    %817 = vmatpush.bf16.msra.mxu0 %v555
    %818 = vmatpush.bf16.msra.mxu0 %v499
    %819 = vmatmul.bf16.gmra.mxu0 %v718
    %v820 = vpop.f32.mrf.mxu0
    %v821 = vadd.f32 0.0, %v820
    %v822 = vpop.f32.mrf.mxu0
    %823 = vdwg.mxu0
    %824 = vmatpush.bf16.msra.mxu0 0
    %825 = vmatpush.bf16.msra.mxu0 0
    %826 = vmatpush.bf16.msra.mxu0 0
    %827 = vmatpush.bf16.msra.mxu0 0
    %828 = vmatpush.bf16.msra.mxu0 0
    %829 = vmatpush.bf16.msra.mxu0 0
    %830 = vmatpush.bf16.msra.mxu0 %v556
    %831 = vmatpush.bf16.msra.mxu0 %v500
    %832 = vmatmul.bf16.gmra.mxu0 %v718
    %v833 = vpop.f32.mrf.mxu0
    %v834 = vadd.f32 0.0, %v833
    %v835 = vpop.f32.mrf.mxu0
    %836 = vdwg.mxu0
    %837 = vmatpush.bf16.msra.mxu0 0
    %838 = vmatpush.bf16.msra.mxu0 0
    %839 = vmatpush.bf16.msra.mxu0 0
    %840 = vmatpush.bf16.msra.mxu0 0
    %841 = vmatpush.bf16.msra.mxu0 0
    %842 = vmatpush.bf16.msra.mxu0 0
    %843 = vmatpush.bf16.msra.mxu0 %v557
    %844 = vmatpush.bf16.msra.mxu0 %v501
    %845 = vmatmul.bf16.gmra.mxu0 %v718
    %v846 = vpop.f32.mrf.mxu0
    %v847 = vadd.f32 0.0, %v846
    %v848 = vpop.f32.mrf.mxu0
    %849 = vdwg.mxu0
    %850 = vmatpush.bf16.msra.mxu0 0
    %851 = vmatpush.bf16.msra.mxu0 0
    %852 = vmatpush.bf16.msra.mxu0 0
    %853 = vmatpush.bf16.msra.mxu0 0
    %854 = vmatpush.bf16.msra.mxu0 0
    %855 = vmatpush.bf16.msra.mxu0 0
    %856 = vmatpush.bf16.msra.mxu0 %v558
    %857 = vmatpush.bf16.msra.mxu0 %v502
    %858 = vmatmul.bf16.gmra.mxu0 %v718
    %v859 = vpop.f32.mrf.mxu0
    %v860 = vadd.f32 0.0, %v859
    %v861 = vpop.f32.mrf.mxu0
    %862 = vdwg.mxu0
    %863 = vmatpush.bf16.msra.mxu0 0
    %864 = vmatpush.bf16.msra.mxu0 0
    %865 = vmatpush.bf16.msra.mxu0 0
    %866 = vmatpush.bf16.msra.mxu0 0
    %867 = vmatpush.bf16.msra.mxu0 0
    %868 = vmatpush.bf16.msra.mxu0 0
    %869 = vmatpush.bf16.msra.mxu0 %v559
    %870 = vmatpush.bf16.msra.mxu0 %v503
    %871 = vmatmul.bf16.gmra.mxu0 %v718
    %v872 = vpop.f32.mrf.mxu0
    %v873 = vadd.f32 0.0, %v872
    %v874 = vpop.f32.mrf.mxu0
    %875 = vdwg.mxu0
    %876 = vmatpush.bf16.msra.mxu0 0
    %877 = vmatpush.bf16.msra.mxu0 0
    %878 = vmatpush.bf16.msra.mxu0 0
    %879 = vmatpush.bf16.msra.mxu0 0
    %880 = vmatpush.bf16.msra.mxu0 0
    %881 = vmatpush.bf16.msra.mxu0 0
    %882 = vmatpush.bf16.msra.mxu0 %v560
    %883 = vmatpush.bf16.msra.mxu0 %v504
    %884 = vmatmul.bf16.gmra.mxu0 %v718
    %v885 = vpop.f32.mrf.mxu0
    %v886 = vadd.f32 0.0, %v885
    %v887 = vpop.f32.mrf.mxu0
    %888 = vdwg.mxu0
    %889 = vmatpush.bf16.msra.mxu0 0
    %890 = vmatpush.bf16.msra.mxu0 0
    %891 = vmatpush.bf16.msra.mxu0 0
    %892 = vmatpush.bf16.msra.mxu0 0
    %893 = vmatpush.bf16.msra.mxu0 0
    %894 = vmatpush.bf16.msra.mxu0 0
    %895 = vmatpush.bf16.msra.mxu0 %v561
    %896 = vmatpush.bf16.msra.mxu0 %v505
    %897 = vmatmul.bf16.gmra.mxu0 %v718
    %v898 = vpop.f32.mrf.mxu0
    %v899 = vadd.f32 0.0, %v898
    %v900 = vpop.f32.mrf.mxu0
    %901 = vdwg.mxu0
    %902 = vmatpush.bf16.msra.mxu0 0
    %903 = vmatpush.bf16.msra.mxu0 0
    %904 = vmatpush.bf16.msra.mxu0 0
    %905 = vmatpush.bf16.msra.mxu0 0
    %906 = vmatpush.bf16.msra.mxu0 0
    %907 = vmatpush.bf16.msra.mxu0 0
    %908 = vmatpush.bf16.msra.mxu0 %v562
    %909 = vmatpush.bf16.msra.mxu0 %v506
    %910 = vmatmul.bf16.gmra.mxu0 %v718
    %v911 = vpop.f32.mrf.mxu0
    %v912 = vadd.f32 0.0, %v911
    %v913 = vpop.f32.mrf.mxu0
    %914 = vdwg.mxu0
    %915 = vmatpush.bf16.msra.mxu0 0
    %916 = vmatpush.bf16.msra.mxu0 0
    %917 = vmatpush.bf16.msra.mxu0 0
    %918 = vmatpush.bf16.msra.mxu0 0
    %919 = vmatpush.bf16.msra.mxu0 0
    %920 = vmatpush.bf16.msra.mxu0 0
    %921 = vmatpush.bf16.msra.mxu0 %v563
    %922 = vmatpush.bf16.msra.mxu0 %v507
    %923 = vmatmul.bf16.gmra.mxu0 %v718
    %v924 = vpop.f32.mrf.mxu0
    %v925 = vadd.f32 0.0, %v924
    %v926 = vpop.f32.mrf.mxu0
    %927 = vdwg.mxu0
    %928 = vmatpush.bf16.msra.mxu0 0
    %929 = vmatpush.bf16.msra.mxu0 0
    %930 = vmatpush.bf16.msra.mxu0 0
    %931 = vmatpush.bf16.msra.mxu0 0
    %932 = vmatpush.bf16.msra.mxu0 0
    %933 = vmatpush.bf16.msra.mxu0 0
    %934 = vmatpush.bf16.msra.mxu0 %v564
    %935 = vmatpush.bf16.msra.mxu0 %v508
    %936 = vmatmul.bf16.gmra.mxu0 %v718
    %v937 = vpop.f32.mrf.mxu0
    %v938 = vadd.f32 0.0, %v937
    %v939 = vpop.f32.mrf.mxu0
    %940 = vdwg.mxu0
    %941 = vmatpush.bf16.msra.mxu0 0
    %942 = vmatpush.bf16.msra.mxu0 0
    %943 = vmatpush.bf16.msra.mxu0 0
    %944 = vmatpush.bf16.msra.mxu0 0
    %945 = vmatpush.bf16.msra.mxu0 0
    %946 = vmatpush.bf16.msra.mxu0 0
    %947 = vmatpush.bf16.msra.mxu0 %v565
    %948 = vmatpush.bf16.msra.mxu0 %v509
    %949 = vmatmul.bf16.gmra.mxu0 %v718
    %v950 = vpop.f32.mrf.mxu0
    %v951 = vadd.f32 0.0, %v950
    %v952 = vpop.f32.mrf.mxu0
    %953 = vdwg.mxu0
    %954 = vmatpush.bf16.msra.mxu0 0
    %955 = vmatpush.bf16.msra.mxu0 0
    %956 = vmatpush.bf16.msra.mxu0 0
    %957 = vmatpush.bf16.msra.mxu0 0
    %958 = vmatpush.bf16.msra.mxu0 0
    %959 = vmatpush.bf16.msra.mxu0 0
    %960 = vmatpush.bf16.msra.mxu0 %v566
    %961 = vmatpush.bf16.msra.mxu0 %v510
    %962 = vmatmul.bf16.gmra.mxu0 %v718
    %v963 = vpop.f32.mrf.mxu0
    %v964 = vadd.f32 0.0, %v963
    %v965 = vpop.f32.mrf.mxu0
    %966 = vdwg.mxu0
    %967 = vmatpush.bf16.msra.mxu0 0
    %968 = vmatpush.bf16.msra.mxu0 0
    %969 = vmatpush.bf16.msra.mxu0 0
    %970 = vmatpush.bf16.msra.mxu0 0
    %971 = vmatpush.bf16.msra.mxu0 0
    %972 = vmatpush.bf16.msra.mxu0 0
    %973 = vmatpush.bf16.msra.mxu0 %v567
    %974 = vmatpush.bf16.msra.mxu0 %v511
    %975 = vmatmul.bf16.gmra.mxu0 %v718
    %v976 = vpop.f32.mrf.mxu0
    %v977 = vadd.f32 0.0, %v976
    %v978 = vpop.f32.mrf.mxu0
    %979 = vdwg.mxu0
    %980 = vmatpush.bf16.msra.mxu0 0
    %981 = vmatpush.bf16.msra.mxu0 0
    %982 = vmatpush.bf16.msra.mxu0 0
    %983 = vmatpush.bf16.msra.mxu0 0
    %984 = vmatpush.bf16.msra.mxu0 0
    %985 = vmatpush.bf16.msra.mxu0 0
    %986 = vmatpush.bf16.msra.mxu0 %v568
    %987 = vmatpush.bf16.msra.mxu0 %v512
    %988 = vmatmul.bf16.gmra.mxu0 %v718
    %v989 = vpop.f32.mrf.mxu0
    %v990 = vadd.f32 0.0, %v989
    %v991 = vpop.f32.mrf.mxu0
    %992 = vdwg.mxu0
    %993 = vmatpush.bf16.msra.mxu0 0
    %994 = vmatpush.bf16.msra.mxu0 0
    %995 = vmatpush.bf16.msra.mxu0 0
    %996 = vmatpush.bf16.msra.mxu0 0
    %997 = vmatpush.bf16.msra.mxu0 0
    %998 = vmatpush.bf16.msra.mxu0 0
    %999 = vmatpush.bf16.msra.mxu0 %v569
    %1000 = vmatpush.bf16.msra.mxu0 %v513
    %1001 = vmatmul.bf16.gmra.mxu0 %v718
    %v1002 = vpop.f32.mrf.mxu0
    %v1003 = vadd.f32 0.0, %v1002
    %v1004 = vpop.f32.mrf.mxu0
    %1005 = vdwg.mxu0
    %1006 = vmatpush.bf16.msra.mxu0 0
    %1007 = vmatpush.bf16.msra.mxu0 0
    %1008 = vmatpush.bf16.msra.mxu0 0
    %1009 = vmatpush.bf16.msra.mxu0 0
    %1010 = vmatpush.bf16.msra.mxu0 0
    %1011 = vmatpush.bf16.msra.mxu0 0
    %1012 = vmatpush.bf16.msra.mxu0 %v570
    %1013 = vmatpush.bf16.msra.mxu0 %v514
    %1014 = vmatmul.bf16.gmra.mxu0 %v718
    %v1015 = vpop.f32.mrf.mxu0
    %v1016 = vadd.f32 0.0, %v1015
    %v1017 = vpop.f32.mrf.mxu0
    %1018 = vdwg.mxu0
    %1019 = vmatpush.bf16.msra.mxu0 0
    %1020 = vmatpush.bf16.msra.mxu0 0
    %1021 = vmatpush.bf16.msra.mxu0 0
    %1022 = vmatpush.bf16.msra.mxu0 0
    %1023 = vmatpush.bf16.msra.mxu0 0
    %1024 = vmatpush.bf16.msra.mxu0 0
    %1025 = vmatpush.bf16.msra.mxu0 %v571
    %1026 = vmatpush.bf16.msra.mxu0 %v515
    %1027 = vmatmul.bf16.gmra.mxu0 %v718
    %v1028 = vpop.f32.mrf.mxu0
    %v1029 = vadd.f32 0.0, %v1028
    %v1030 = vpop.f32.mrf.mxu0
    %1031 = vdwg.mxu0
    %1032 = vmatpush.bf16.msra.mxu0 0
    %1033 = vmatpush.bf16.msra.mxu0 0
    %1034 = vmatpush.bf16.msra.mxu0 0
    %1035 = vmatpush.bf16.msra.mxu0 0
    %1036 = vmatpush.bf16.msra.mxu0 0
    %1037 = vmatpush.bf16.msra.mxu0 0
    %1038 = vmatpush.bf16.msra.mxu0 %v572
    %1039 = vmatpush.bf16.msra.mxu0 %v516
    %1040 = vmatmul.bf16.gmra.mxu0 %v718
    %v1041 = vpop.f32.mrf.mxu0
    %v1042 = vadd.f32 0.0, %v1041
    %v1043 = vpop.f32.mrf.mxu0
    %1044 = vdwg.mxu0
    %1045 = vmatpush.bf16.msra.mxu0 0
    %1046 = vmatpush.bf16.msra.mxu0 0
    %1047 = vmatpush.bf16.msra.mxu0 0
    %1048 = vmatpush.bf16.msra.mxu0 0
    %1049 = vmatpush.bf16.msra.mxu0 0
    %1050 = vmatpush.bf16.msra.mxu0 0
    %1051 = vmatpush.bf16.msra.mxu0 %v573
    %1052 = vmatpush.bf16.msra.mxu0 %v517
    %1053 = vmatmul.bf16.gmra.mxu0 %v718
    %v1054 = vpop.f32.mrf.mxu0
    %v1055 = vadd.f32 0.0, %v1054
    %v1056 = vpop.f32.mrf.mxu0
    %1057 = vdwg.mxu0
    %1058 = vmatpush.bf16.msra.mxu0 0
    %1059 = vmatpush.bf16.msra.mxu0 0
    %1060 = vmatpush.bf16.msra.mxu0 0
    %1061 = vmatpush.bf16.msra.mxu0 0
    %1062 = vmatpush.bf16.msra.mxu0 0
    %1063 = vmatpush.bf16.msra.mxu0 0
    %1064 = vmatpush.bf16.msra.mxu0 %v574
    %1065 = vmatpush.bf16.msra.mxu0 %v518
    %1066 = vmatmul.bf16.gmra.mxu0 %v718
    %v1067 = vpop.f32.mrf.mxu0
    %v1068 = vadd.f32 0.0, %v1067
    %v1069 = vpop.f32.mrf.mxu0
    %1070 = vdwg.mxu0
    %1071 = vmatpush.bf16.msra.mxu0 0
    %1072 = vmatpush.bf16.msra.mxu0 0
    %1073 = vmatpush.bf16.msra.mxu0 0
    %1074 = vmatpush.bf16.msra.mxu0 0
    %1075 = vmatpush.bf16.msra.mxu0 0
    %1076 = vmatpush.bf16.msra.mxu0 0
    %1077 = vmatpush.bf16.msra.mxu0 %v575
    %1078 = vmatpush.bf16.msra.mxu0 %v519
    %1079 = vmatmul.bf16.gmra.mxu0 %v718
    %v1080 = vpop.f32.mrf.mxu0
    %v1081 = vadd.f32 0.0, %v1080
    %v1082 = vpop.f32.mrf.mxu0
    %1083 = vdwg.mxu0
    %1084 = vmatpush.bf16.msra.mxu0 0
    %1085 = vmatpush.bf16.msra.mxu0 0
    %1086 = vmatpush.bf16.msra.mxu0 0
    %1087 = vmatpush.bf16.msra.mxu0 0
    %1088 = vmatpush.bf16.msra.mxu0 0
    %1089 = vmatpush.bf16.msra.mxu0 0
    %1090 = vmatpush.bf16.msra.mxu0 %v576
    %1091 = vmatpush.bf16.msra.mxu0 %v520
    %1092 = vmatmul.bf16.gmra.mxu0 %v718
    %v1093 = vpop.f32.mrf.mxu0
    %v1094 = vadd.f32 0.0, %v1093
    %v1095 = vpop.f32.mrf.mxu0
    %1096 = vdwg.mxu0
    %1097 = vmatpush.bf16.msra.mxu0 0
    %1098 = vmatpush.bf16.msra.mxu0 0
    %1099 = vmatpush.bf16.msra.mxu0 0
    %1100 = vmatpush.bf16.msra.mxu0 0
    %1101 = vmatpush.bf16.msra.mxu0 0
    %1102 = vmatpush.bf16.msra.mxu0 0
    %1103 = vmatpush.bf16.msra.mxu0 %v577
    %1104 = vmatpush.bf16.msra.mxu0 %v521
    %1105 = vmatmul.bf16.gmra.mxu0 %v718
    %v1106 = vpop.f32.mrf.mxu0
    %v1107 = vadd.f32 0.0, %v1106
    %v1108 = vpop.f32.mrf.mxu0
    %1109 = vdwg.mxu0
    %1110 = vmatpush.bf16.msra.mxu0 0
    %1111 = vmatpush.bf16.msra.mxu0 0
    %1112 = vmatpush.bf16.msra.mxu0 0
    %1113 = vmatpush.bf16.msra.mxu0 0
    %1114 = vmatpush.bf16.msra.mxu0 0
    %1115 = vmatpush.bf16.msra.mxu0 0
    %1116 = vmatpush.bf16.msra.mxu0 %v578
    %1117 = vmatpush.bf16.msra.mxu0 %v522
    %1118 = vmatmul.bf16.gmra.mxu0 %v718
    %v1119 = vpop.f32.mrf.mxu0
    %v1120 = vadd.f32 0.0, %v1119
    %v1121 = vpop.f32.mrf.mxu0
    %1122 = vdwg.mxu0
    %1123 = vmatpush.bf16.msra.mxu0 0
    %1124 = vmatpush.bf16.msra.mxu0 0
    %1125 = vmatpush.bf16.msra.mxu0 0
    %1126 = vmatpush.bf16.msra.mxu0 0
    %1127 = vmatpush.bf16.msra.mxu0 0
    %1128 = vmatpush.bf16.msra.mxu0 0
    %1129 = vmatpush.bf16.msra.mxu0 %v579
    %1130 = vmatpush.bf16.msra.mxu0 %v523
    %1131 = vmatmul.bf16.gmra.mxu0 %v718
    %v1132 = vpop.f32.mrf.mxu0
    %v1133 = vadd.f32 0.0, %v1132
    %v1134 = vpop.f32.mrf.mxu0
    %1135 = vdwg.mxu0
    %1136 = vmatpush.bf16.msra.mxu0 0
    %1137 = vmatpush.bf16.msra.mxu0 0
    %1138 = vmatpush.bf16.msra.mxu0 0
    %1139 = vmatpush.bf16.msra.mxu0 0
    %1140 = vmatpush.bf16.msra.mxu0 0
    %1141 = vmatpush.bf16.msra.mxu0 0
    %1142 = vmatpush.bf16.msra.mxu0 %v580
    %1143 = vmatpush.bf16.msra.mxu0 %v524
    %1144 = vmatmul.bf16.gmra.mxu0 %v718
    %v1145 = vpop.f32.mrf.mxu0
    %v1146 = vadd.f32 0.0, %v1145
    %v1147 = vpop.f32.mrf.mxu0
    %1148 = vdwg.mxu0
    %1149 = vmatpush.bf16.msra.mxu0 0
    %1150 = vmatpush.bf16.msra.mxu0 0
    %1151 = vmatpush.bf16.msra.mxu0 0
    %1152 = vmatpush.bf16.msra.mxu0 0
    %1153 = vmatpush.bf16.msra.mxu0 0
    %1154 = vmatpush.bf16.msra.mxu0 0
    %1155 = vmatpush.bf16.msra.mxu0 %v581
    %1156 = vmatpush.bf16.msra.mxu0 %v525
    %1157 = vmatmul.bf16.gmra.mxu0 %v718
    %v1158 = vpop.f32.mrf.mxu0
    %v1159 = vadd.f32 0.0, %v1158
    %v1160 = vpop.f32.mrf.mxu0
    %1161 = vdwg.mxu0
    %1162 = vmatpush.bf16.msra.mxu0 0
    %1163 = vmatpush.bf16.msra.mxu0 0
    %1164 = vmatpush.bf16.msra.mxu0 0
    %1165 = vmatpush.bf16.msra.mxu0 0
    %1166 = vmatpush.bf16.msra.mxu0 0
    %1167 = vmatpush.bf16.msra.mxu0 0
    %1168 = vmatpush.bf16.msra.mxu0 %v582
    %1169 = vmatpush.bf16.msra.mxu0 %v526
    %1170 = vmatmul.bf16.gmra.mxu0 %v718
    %v1171 = vpop.f32.mrf.mxu0
    %v1172 = vadd.f32 0.0, %v1171
    %v1173 = vpop.f32.mrf.mxu0
    %1174 = vdwg.mxu0
    %1175 = vmatpush.bf16.msra.mxu0 0
    %1176 = vmatpush.bf16.msra.mxu0 0
    %1177 = vmatpush.bf16.msra.mxu0 0
    %1178 = vmatpush.bf16.msra.mxu0 0
    %1179 = vmatpush.bf16.msra.mxu0 0
    %1180 = vmatpush.bf16.msra.mxu0 0
    %1181 = vmatpush.bf16.msra.mxu0 %v583
    %1182 = vmatpush.bf16.msra.mxu0 %v527
    %1183 = vmatmul.bf16.gmra.mxu0 %v718
    %v1184 = vpop.f32.mrf.mxu0
    %v1185 = vadd.f32 0.0, %v1184
    %v1186 = vpop.f32.mrf.mxu0
    %1187 = vdwg.mxu0
    %1188 = vmatpush.bf16.msra.mxu0 0
    %1189 = vmatpush.bf16.msra.mxu0 0
    %1190 = vmatpush.bf16.msra.mxu0 0
    %1191 = vmatpush.bf16.msra.mxu0 0
    %1192 = vmatpush.bf16.msra.mxu0 0
    %1193 = vmatpush.bf16.msra.mxu0 0
    %1194 = vmatpush.bf16.msra.mxu0 %v584
    %1195 = vmatpush.bf16.msra.mxu0 %v528
    %1196 = vmatmul.bf16.gmra.mxu0 %v718
    %v1197 = vpop.f32.mrf.mxu0
    %v1198 = vadd.f32 0.0, %v1197
    %v1199 = vpop.f32.mrf.mxu0
    %1200 = vdwg.mxu0
    %1201 = vmatpush.bf16.msra.mxu0 0
    %1202 = vmatpush.bf16.msra.mxu0 0
    %1203 = vmatpush.bf16.msra.mxu0 0
    %1204 = vmatpush.bf16.msra.mxu0 0
    %1205 = vmatpush.bf16.msra.mxu0 0
    %1206 = vmatpush.bf16.msra.mxu0 0
    %1207 = vmatpush.bf16.msra.mxu0 %v585
    %1208 = vmatpush.bf16.msra.mxu0 %v529
    %1209 = vmatmul.bf16.gmra.mxu0 %v718
    %v1210 = vpop.f32.mrf.mxu0
    %v1211 = vadd.f32 0.0, %v1210
    %v1212 = vpop.f32.mrf.mxu0
    %1213 = vdwg.mxu0
    %1214 = vmatpush.bf16.msra.mxu0 0
    %1215 = vmatpush.bf16.msra.mxu0 0
    %1216 = vmatpush.bf16.msra.mxu0 0
    %1217 = vmatpush.bf16.msra.mxu0 0
    %1218 = vmatpush.bf16.msra.mxu0 0
    %1219 = vmatpush.bf16.msra.mxu0 0
    %1220 = vmatpush.bf16.msra.mxu0 %v586
    %1221 = vmatpush.bf16.msra.mxu0 %v530
    %1222 = vmatmul.bf16.gmra.mxu0 %v718
    %v1223 = vpop.f32.mrf.mxu0
    %v1224 = vadd.f32 0.0, %v1223
    %v1225 = vpop.f32.mrf.mxu0
    %1226 = vdwg.mxu0
    %1227 = vmatpush.bf16.msra.mxu0 0
    %1228 = vmatpush.bf16.msra.mxu0 0
    %1229 = vmatpush.bf16.msra.mxu0 0
    %1230 = vmatpush.bf16.msra.mxu0 0
    %1231 = vmatpush.bf16.msra.mxu0 0
    %1232 = vmatpush.bf16.msra.mxu0 0
    %1233 = vmatpush.bf16.msra.mxu0 %v587
    %1234 = vmatpush.bf16.msra.mxu0 %v531
    %1235 = vmatmul.bf16.gmra.mxu0 %v718
    %v1236 = vpop.f32.mrf.mxu0
    %v1237 = vadd.f32 0.0, %v1236
    %v1238 = vpop.f32.mrf.mxu0
    %1239 = vdwg.mxu0
    %1240 = vmatpush.bf16.msra.mxu0 0
    %1241 = vmatpush.bf16.msra.mxu0 0
    %1242 = vmatpush.bf16.msra.mxu0 0
    %1243 = vmatpush.bf16.msra.mxu0 0
    %1244 = vmatpush.bf16.msra.mxu0 0
    %1245 = vmatpush.bf16.msra.mxu0 0
    %1246 = vmatpush.bf16.msra.mxu0 %v588
    %1247 = vmatpush.bf16.msra.mxu0 %v532
    %1248 = vmatmul.bf16.gmra.mxu0 %v718
    %v1249 = vpop.f32.mrf.mxu0
    %v1250 = vadd.f32 0.0, %v1249
    %v1251 = vpop.f32.mrf.mxu0
    %1252 = vdwg.mxu0
    %1253 = vmatpush.bf16.msra.mxu0 0
    %1254 = vmatpush.bf16.msra.mxu0 0
    %1255 = vmatpush.bf16.msra.mxu0 0
    %1256 = vmatpush.bf16.msra.mxu0 0
    %1257 = vmatpush.bf16.msra.mxu0 0
    %1258 = vmatpush.bf16.msra.mxu0 0
    %1259 = vmatpush.bf16.msra.mxu0 %v589
    %1260 = vmatpush.bf16.msra.mxu0 %v533
    %1261 = vmatmul.bf16.gmra.mxu0 %v718
    %v1262 = vpop.f32.mrf.mxu0
    %v1263 = vadd.f32 0.0, %v1262
    %v1264 = vpop.f32.mrf.mxu0
    %1265 = vdwg.mxu0
    %1266 = vmatpush.bf16.msra.mxu0 0
    %1267 = vmatpush.bf16.msra.mxu0 0
    %1268 = vmatpush.bf16.msra.mxu0 0
    %1269 = vmatpush.bf16.msra.mxu0 0
    %1270 = vmatpush.bf16.msra.mxu0 0
    %1271 = vmatpush.bf16.msra.mxu0 0
    %1272 = vmatpush.bf16.msra.mxu0 %v590
    %1273 = vmatpush.bf16.msra.mxu0 %v534
    %1274 = vmatmul.bf16.gmra.mxu0 %v718
    %v1275 = vpop.f32.mrf.mxu0
    %v1276 = vadd.f32 0.0, %v1275
    %v1277 = vpop.f32.mrf.mxu0
    %1278 = vdwg.mxu0
    %1279 = vmatpush.bf16.msra.mxu0 0
    %1280 = vmatpush.bf16.msra.mxu0 0
    %1281 = vmatpush.bf16.msra.mxu0 0
    %1282 = vmatpush.bf16.msra.mxu0 0
    %1283 = vmatpush.bf16.msra.mxu0 0
    %1284 = vmatpush.bf16.msra.mxu0 0
    %1285 = vmatpush.bf16.msra.mxu0 %v591
    %1286 = vmatpush.bf16.msra.mxu0 %v535
    %1287 = vmatmul.bf16.gmra.mxu0 %v718
    %v1288 = vpop.f32.mrf.mxu0
    %v1289 = vadd.f32 0.0, %v1288
    %v1290 = vpop.f32.mrf.mxu0
    %1291 = vdwg.mxu0
    %1292 = vmatpush.bf16.msra.mxu0 0
    %1293 = vmatpush.bf16.msra.mxu0 0
    %1294 = vmatpush.bf16.msra.mxu0 0
    %1295 = vmatpush.bf16.msra.mxu0 0
    %1296 = vmatpush.bf16.msra.mxu0 0
    %1297 = vmatpush.bf16.msra.mxu0 0
    %1298 = vmatpush.bf16.msra.mxu0 %v592
    %1299 = vmatpush.bf16.msra.mxu0 %v536
    %1300 = vmatmul.bf16.gmra.mxu0 %v718
    %v1301 = vpop.f32.mrf.mxu0
    %v1302 = vadd.f32 0.0, %v1301
    %v1303 = vpop.f32.mrf.mxu0
    %1304 = vdwg.mxu0
    %1305 = vmatpush.bf16.msra.mxu0 0
    %1306 = vmatpush.bf16.msra.mxu0 0
    %1307 = vmatpush.bf16.msra.mxu0 0
    %1308 = vmatpush.bf16.msra.mxu0 0
    %1309 = vmatpush.bf16.msra.mxu0 0
    %1310 = vmatpush.bf16.msra.mxu0 0
    %1311 = vmatpush.bf16.msra.mxu0 %v593
    %1312 = vmatpush.bf16.msra.mxu0 %v537
    %1313 = vmatmul.bf16.gmra.mxu0 %v718
    %v1314 = vpop.f32.mrf.mxu0
    %v1315 = vadd.f32 0.0, %v1314
    %v1316 = vpop.f32.mrf.mxu0
    %1317 = vdwg.mxu0
    %1318 = vmatpush.bf16.msra.mxu0 0
    %1319 = vmatpush.bf16.msra.mxu0 0
    %1320 = vmatpush.bf16.msra.mxu0 0
    %1321 = vmatpush.bf16.msra.mxu0 0
    %1322 = vmatpush.bf16.msra.mxu0 0
    %1323 = vmatpush.bf16.msra.mxu0 0
    %1324 = vmatpush.bf16.msra.mxu0 %v594
    %1325 = vmatpush.bf16.msra.mxu0 %v538
    %1326 = vmatmul.bf16.gmra.mxu0 %v718
    %v1327 = vpop.f32.mrf.mxu0
    %v1328 = vadd.f32 0.0, %v1327
    %v1329 = vpop.f32.mrf.mxu0
    %1330 = vdwg.mxu0
    %1331 = vmatpush.bf16.msra.mxu0 0
    %1332 = vmatpush.bf16.msra.mxu0 0
    %1333 = vmatpush.bf16.msra.mxu0 0
    %1334 = vmatpush.bf16.msra.mxu0 0
    %1335 = vmatpush.bf16.msra.mxu0 0
    %1336 = vmatpush.bf16.msra.mxu0 0
    %1337 = vmatpush.bf16.msra.mxu0 %v595
    %1338 = vmatpush.bf16.msra.mxu0 %v539
    %1339 = vmatmul.bf16.gmra.mxu0 %v718
    %v1340 = vpop.f32.mrf.mxu0
    %v1341 = vadd.f32 0.0, %v1340
    %v1342 = vpop.f32.mrf.mxu0
    %1343 = vdwg.mxu0
    %1344 = vmatpush.bf16.msra.mxu0 0
    %1345 = vmatpush.bf16.msra.mxu0 0
    %1346 = vmatpush.bf16.msra.mxu0 0
    %1347 = vmatpush.bf16.msra.mxu0 0
    %1348 = vmatpush.bf16.msra.mxu0 0
    %1349 = vmatpush.bf16.msra.mxu0 0
    %1350 = vmatpush.bf16.msra.mxu0 %v596
    %1351 = vmatpush.bf16.msra.mxu0 %v540
    %1352 = vmatmul.bf16.gmra.mxu0 %v718
    %v1353 = vpop.f32.mrf.mxu0
    %v1354 = vadd.f32 0.0, %v1353
    %v1355 = vpop.f32.mrf.mxu0
    %1356 = vdwg.mxu0
    %1357 = vmatpush.bf16.msra.mxu0 0
    %1358 = vmatpush.bf16.msra.mxu0 0
    %1359 = vmatpush.bf16.msra.mxu0 0
    %1360 = vmatpush.bf16.msra.mxu0 0
    %1361 = vmatpush.bf16.msra.mxu0 0
    %1362 = vmatpush.bf16.msra.mxu0 0
    %1363 = vmatpush.bf16.msra.mxu0 %v597
    %1364 = vmatpush.bf16.msra.mxu0 %v541
    %1365 = vmatmul.bf16.gmra.mxu0 %v718
    %v1366 = vpop.f32.mrf.mxu0
    %v1367 = vadd.f32 0.0, %v1366
    %v1368 = vpop.f32.mrf.mxu0
    %1369 = vdwg.mxu0
    %1370 = vmatpush.bf16.msra.mxu0 0
    %1371 = vmatpush.bf16.msra.mxu0 0
    %1372 = vmatpush.bf16.msra.mxu0 0
    %1373 = vmatpush.bf16.msra.mxu0 0
    %1374 = vmatpush.bf16.msra.mxu0 0
    %1375 = vmatpush.bf16.msra.mxu0 0
    %1376 = vmatpush.bf16.msra.mxu0 %v598
    %1377 = vmatpush.bf16.msra.mxu0 %v542
    %1378 = vmatmul.bf16.gmra.mxu0 %v718
    %v1379 = vpop.f32.mrf.mxu0
    %v1380 = vadd.f32 0.0, %v1379
    %v1381 = vpop.f32.mrf.mxu0
    %1382 = vdwg.mxu0
    %1383 = vmatpush.bf16.msra.mxu0 0
    %1384 = vmatpush.bf16.msra.mxu0 0
    %1385 = vmatpush.bf16.msra.mxu0 0
    %1386 = vmatpush.bf16.msra.mxu0 0
    %1387 = vmatpush.bf16.msra.mxu0 0
    %1388 = vmatpush.bf16.msra.mxu0 0
    %1389 = vmatpush.bf16.msra.mxu0 %v599
    %1390 = vmatpush.bf16.msra.mxu0 %v543
    %1391 = vmatmul.bf16.gmra.mxu0 %v718
    %v1392 = vpop.f32.mrf.mxu0
    %v1393 = vadd.f32 0.0, %v1392
    %v1394 = vpop.f32.mrf.mxu0
    %1395 = vdwg.mxu0
    %1396 = vmatpush.bf16.msra.mxu0 0
    %1397 = vmatpush.bf16.msra.mxu0 0
    %1398 = vmatpush.bf16.msra.mxu0 0
    %1399 = vmatpush.bf16.msra.mxu0 0
    %1400 = vmatpush.bf16.msra.mxu0 0
    %1401 = vmatpush.bf16.msra.mxu0 0
    %1402 = vmatpush.bf16.msra.mxu0 %v600
    %1403 = vmatpush.bf16.msra.mxu0 %v544
    %1404 = vmatmul.bf16.gmra.mxu0 %v718
    %v1405 = vpop.f32.mrf.mxu0
    %v1406 = vadd.f32 0.0, %v1405
    %v1407 = vpop.f32.mrf.mxu0
    %1408 = vdwg.mxu0
    %1409 = vmatpush.bf16.msra.mxu0 0
    %1410 = vmatpush.bf16.msra.mxu0 0
    %1411 = vmatpush.bf16.msra.mxu0 0
    %1412 = vmatpush.bf16.msra.mxu0 0
    %1413 = vmatpush.bf16.msra.mxu0 0
    %1414 = vmatpush.bf16.msra.mxu0 0
    %1415 = vmatpush.bf16.msra.mxu0 %v601
    %1416 = vmatpush.bf16.msra.mxu0 %v545
    %1417 = vmatmul.bf16.gmra.mxu0 %v718
    %v1418 = vpop.f32.mrf.mxu0
    %v1419 = vadd.f32 0.0, %v1418
    %v1420 = vpop.f32.mrf.mxu0
    %1421 = vdwg.mxu0
    %1422 = vmatpush.bf16.msra.mxu0 0
    %1423 = vmatpush.bf16.msra.mxu0 0
    %1424 = vmatpush.bf16.msra.mxu0 0
    %1425 = vmatpush.bf16.msra.mxu0 0
    %1426 = vmatpush.bf16.msra.mxu0 0
    %1427 = vmatpush.bf16.msra.mxu0 0
    %1428 = vmatpush.bf16.msra.mxu0 %v602
    %1429 = vmatpush.bf16.msra.mxu0 %v546
    %1430 = vmatmul.bf16.gmra.mxu0 %v718
    %v1431 = vpop.f32.mrf.mxu0
    %v1432 = vadd.f32 0.0, %v1431
    %v1433 = vpop.f32.mrf.mxu0
    %1434 = vdwg.mxu0
    %1435 = vmatpush.bf16.msra.mxu0 0
    %1436 = vmatpush.bf16.msra.mxu0 0
    %1437 = vmatpush.bf16.msra.mxu0 0
    %1438 = vmatpush.bf16.msra.mxu0 0
    %1439 = vmatpush.bf16.msra.mxu0 0
    %1440 = vmatpush.bf16.msra.mxu0 0
    %1441 = vmatpush.bf16.msra.mxu0 %v603
    %1442 = vmatpush.bf16.msra.mxu0 %v547
    %1443 = vmatmul.bf16.gmra.mxu0 %v718
    %v1444 = vpop.f32.mrf.mxu0
    %v1445 = vadd.f32 0.0, %v1444
    %v1446 = vpop.f32.mrf.mxu0
    %1447 = vdwg.mxu0
    %v1448 = vmax.f32 %v730, %v782
    %v1449 = vmax.f32 %v743, %v795
    %v1450 = vmax.f32 %v756, %v808
    %v1451 = vmax.f32 %v769, %v821
    %v1452 = vmax.f32 %v1448, %v834
    %v1453 = vmax.f32 %v1449, %v847
    %v1454 = vmax.f32 %v1450, %v860
    %v1455 = vmax.f32 %v1451, %v873
    %v1456 = vmax.f32 %v1452, %v886
    %v1457 = vmax.f32 %v1453, %v899
    %v1458 = vmax.f32 %v1454, %v912
    %v1459 = vmax.f32 %v1455, %v925
    %v1460 = vmax.f32 %v1456, %v938
    %v1461 = vmax.f32 %v1457, %v951
    %v1462 = vmax.f32 %v1458, %v964
    %v1463 = vmax.f32 %v1459, %v977
    %v1464 = vmax.f32 %v1460, %v990
    %v1465 = vmax.f32 %v1461, %v1003
    %v1466 = vmax.f32 %v1462, %v1016
    %v1467 = vmax.f32 %v1463, %v1029
    %v1468 = vmax.f32 %v1464, %v1042
    %v1469 = vmax.f32 %v1465, %v1055
    %v1470 = vmax.f32 %v1466, %v1068
    %v1471 = vmax.f32 %v1467, %v1081
    %v1472 = vmax.f32 %v1468, %v1094
    %v1473 = vmax.f32 %v1469, %v1107
    %v1474 = vmax.f32 %v1470, %v1120
    %v1475 = vmax.f32 %v1471, %v1133
    %v1476 = vmax.f32 %v1472, %v1146
    %v1477 = vmax.f32 %v1473, %v1159
    %v1478 = vmax.f32 %v1474, %v1172
    %v1479 = vmax.f32 %v1475, %v1185
    %v1480 = vmax.f32 %v1476, %v1198
    %v1481 = vmax.f32 %v1477, %v1211
    %v1482 = vmax.f32 %v1478, %v1224
    %v1483 = vmax.f32 %v1479, %v1237
    %v1484 = vmax.f32 %v1480, %v1250
    %v1485 = vmax.f32 %v1481, %v1263
    %v1486 = vmax.f32 %v1482, %v1276
    %v1487 = vmax.f32 %v1483, %v1289
    %v1488 = vmax.f32 %v1484, %v1302
    %v1489 = vmax.f32 %v1485, %v1315
    %v1490 = vmax.f32 %v1486, %v1328
    %v1491 = vmax.f32 %v1487, %v1341
    %v1492 = vmax.f32 %v1488, %v1354
    %v1493 = vmax.f32 %v1489, %v1367
    %v1494 = vmax.f32 %v1490, %v1380
    %v1495 = vmax.f32 %v1491, %v1393
    %v1496 = vmax.f32 %v1492, %v1406
    %v1497 = vmax.f32 %v1493, %v1419
    %v1498 = vmax.f32 %v1494, %v1432
    %v1499 = vmax.f32 %v1495, %v1445
    %v1500 = vmax.f32 %v1496, %v1497
    %v1501 = vmax.f32 %v1498, %v1499
    %v1502 = vmax.f32 %v1500, %v1501
    %1503 = vmax.xlane.f32.xlu0 %v1502
    %v1504 = vpop.xlane.xlu0 %1503
    %v1505 = vsub.f32 %v730, %v1504
    %v1506 = vsub.f32 %v743, %v1504
    %v1507 = vsub.f32 %v756, %v1504
    %v1508 = vsub.f32 %v769, %v1504
    %v1509 = vsub.f32 %v782, %v1504
    %v1510 = vsub.f32 %v795, %v1504
    %v1511 = vsub.f32 %v808, %v1504
    %v1512 = vsub.f32 %v821, %v1504
    %v1513 = vsub.f32 %v834, %v1504
    %v1514 = vsub.f32 %v847, %v1504
    %v1515 = vsub.f32 %v860, %v1504
    %v1516 = vsub.f32 %v873, %v1504
    %v1517 = vsub.f32 %v886, %v1504
    %v1518 = vsub.f32 %v899, %v1504
    %v1519 = vsub.f32 %v912, %v1504
    %v1520 = vsub.f32 %v925, %v1504
    %v1521 = vsub.f32 %v938, %v1504
    %v1522 = vsub.f32 %v951, %v1504
    %v1523 = vsub.f32 %v964, %v1504
    %v1524 = vsub.f32 %v977, %v1504
    %v1525 = vsub.f32 %v990, %v1504
    %v1526 = vsub.f32 %v1003, %v1504
    %v1527 = vsub.f32 %v1016, %v1504
    %v1528 = vsub.f32 %v1029, %v1504
    %v1529 = vsub.f32 %v1042, %v1504
    %v1530 = vsub.f32 %v1055, %v1504
    %v1531 = vsub.f32 %v1068, %v1504
    %v1532 = vsub.f32 %v1081, %v1504
    %v1533 = vsub.f32 %v1094, %v1504
    %v1534 = vsub.f32 %v1107, %v1504
    %v1535 = vsub.f32 %v1120, %v1504
    %v1536 = vsub.f32 %v1133, %v1504
    %v1537 = vsub.f32 %v1146, %v1504
    %v1538 = vsub.f32 %v1159, %v1504
    %v1539 = vsub.f32 %v1172, %v1504
    %v1540 = vsub.f32 %v1185, %v1504
    %v1541 = vsub.f32 %v1198, %v1504
    %v1542 = vsub.f32 %v1211, %v1504
    %v1543 = vsub.f32 %v1224, %v1504
    %v1544 = vsub.f32 %v1237, %v1504
    %v1545 = vsub.f32 %v1250, %v1504
    %v1546 = vsub.f32 %v1263, %v1504
    %v1547 = vsub.f32 %v1276, %v1504
    %v1548 = vsub.f32 %v1289, %v1504
    %v1549 = vsub.f32 %v1302, %v1504
    %v1550 = vsub.f32 %v1315, %v1504
    %v1551 = vsub.f32 %v1328, %v1504
    %v1552 = vsub.f32 %v1341, %v1504
    %v1553 = vsub.f32 %v1354, %v1504
    %v1554 = vsub.f32 %v1367, %v1504
    %v1555 = vsub.f32 %v1380, %v1504
    %v1556 = vsub.f32 %v1393, %v1504
    %v1557 = vsub.f32 %v1406, %v1504
    %v1558 = vsub.f32 %v1419, %v1504
    %v1559 = vsub.f32 %v1432, %v1504
    %v1560 = vsub.f32 %v1445, %v1504
    %v1561 = vmul.f32 %v1505, 1.442695
    %v1562 = vpow.pop %v1561
    %v1563 = vmul.f32 %v1506, 1.442695
    %v1564 = vpow.pop %v1563
    %v1565 = vmul.f32 %v1507, 1.442695
    %v1566 = vpow.pop %v1565
    %v1567 = vmul.f32 %v1508, 1.442695
    %v1568 = vpow.pop %v1567
    %v1569 = vmul.f32 %v1509, 1.442695
    %v1570 = vpow.pop %v1569
    %v1571 = vmul.f32 %v1510, 1.442695
    %v1572 = vpow.pop %v1571
    %v1573 = vmul.f32 %v1511, 1.442695
    %v1574 = vpow.pop %v1573
    %v1575 = vmul.f32 %v1512, 1.442695
    %v1576 = vpow.pop %v1575
    %v1577 = vmul.f32 %v1513, 1.442695
    %v1578 = vpow.pop %v1577
    %v1579 = vmul.f32 %v1514, 1.442695
    %v1580 = vpow.pop %v1579
    %v1581 = vmul.f32 %v1515, 1.442695
    %v1582 = vpow.pop %v1581
    %v1583 = vmul.f32 %v1516, 1.442695
    %v1584 = vpow.pop %v1583
    %v1585 = vmul.f32 %v1517, 1.442695
    %v1586 = vpow.pop %v1585
    %v1587 = vmul.f32 %v1518, 1.442695
    %v1588 = vpow.pop %v1587
    %v1589 = vmul.f32 %v1519, 1.442695
    %v1590 = vpow.pop %v1589
    %v1591 = vmul.f32 %v1520, 1.442695
    %v1592 = vpow.pop %v1591
    %v1593 = vmul.f32 %v1521, 1.442695
    %v1594 = vpow.pop %v1593
    %v1595 = vmul.f32 %v1522, 1.442695
    %v1596 = vpow.pop %v1595
    %v1597 = vmul.f32 %v1523, 1.442695
    %v1598 = vpow.pop %v1597
    %v1599 = vmul.f32 %v1524, 1.442695
    %v1600 = vpow.pop %v1599
    %v1601 = vmul.f32 %v1525, 1.442695
    %v1602 = vpow.pop %v1601
    %v1603 = vmul.f32 %v1526, 1.442695
    %v1604 = vpow.pop %v1603
    %v1605 = vmul.f32 %v1527, 1.442695
    %v1606 = vpow.pop %v1605
    %v1607 = vmul.f32 %v1528, 1.442695
    %v1608 = vpow.pop %v1607
    %v1609 = vmul.f32 %v1529, 1.442695
    %v1610 = vpow.pop %v1609
    %v1611 = vmul.f32 %v1530, 1.442695
    %v1612 = vpow.pop %v1611
    %v1613 = vmul.f32 %v1531, 1.442695
    %v1614 = vpow.pop %v1613
    %v1615 = vmul.f32 %v1532, 1.442695
    %v1616 = vpow.pop %v1615
    %v1617 = vmul.f32 %v1533, 1.442695
    %v1618 = vpow.pop %v1617
    %v1619 = vmul.f32 %v1534, 1.442695
    %v1620 = vpow.pop %v1619
    %v1621 = vmul.f32 %v1535, 1.442695
    %v1622 = vpow.pop %v1621
    %v1623 = vmul.f32 %v1536, 1.442695
    %v1624 = vpow.pop %v1623
    %v1625 = vmul.f32 %v1537, 1.442695
    %v1626 = vpow.pop %v1625
    %v1627 = vmul.f32 %v1538, 1.442695
    %v1628 = vpow.pop %v1627
    %v1629 = vmul.f32 %v1539, 1.442695
    %v1630 = vpow.pop %v1629
    %v1631 = vmul.f32 %v1540, 1.442695
    %v1632 = vpow.pop %v1631
    %v1633 = vmul.f32 %v1541, 1.442695
    %v1634 = vpow.pop %v1633
    %v1635 = vmul.f32 %v1542, 1.442695
    %v1636 = vpow.pop %v1635
    %v1637 = vmul.f32 %v1543, 1.442695
    %v1638 = vpow.pop %v1637
    %v1639 = vmul.f32 %v1544, 1.442695
    %v1640 = vpow.pop %v1639
    %v1641 = vmul.f32 %v1545, 1.442695
    %v1642 = vpow.pop %v1641
    %v1643 = vmul.f32 %v1546, 1.442695
    %v1644 = vpow.pop %v1643
    %v1645 = vmul.f32 %v1547, 1.442695
    %v1646 = vpow.pop %v1645
    %v1647 = vmul.f32 %v1548, 1.442695
    %v1648 = vpow.pop %v1647
    %v1649 = vmul.f32 %v1549, 1.442695
    %v1650 = vpow.pop %v1649
    %v1651 = vmul.f32 %v1550, 1.442695
    %v1652 = vpow.pop %v1651
    %v1653 = vmul.f32 %v1551, 1.442695
    %v1654 = vpow.pop %v1653
    %v1655 = vmul.f32 %v1552, 1.442695
    %v1656 = vpow.pop %v1655
    %v1657 = vmul.f32 %v1553, 1.442695
    %v1658 = vpow.pop %v1657
    %v1659 = vmul.f32 %v1554, 1.442695
    %v1660 = vpow.pop %v1659
    %v1661 = vmul.f32 %v1555, 1.442695
    %v1662 = vpow.pop %v1661
    %v1663 = vmul.f32 %v1556, 1.442695
    %v1664 = vpow.pop %v1663
    %v1665 = vmul.f32 %v1557, 1.442695
    %v1666 = vpow.pop %v1665
    %v1667 = vmul.f32 %v1558, 1.442695
    %v1668 = vpow.pop %v1667
    %v1669 = vmul.f32 %v1559, 1.442695
    %v1670 = vpow.pop %v1669
    %v1671 = vmul.f32 %v1560, 1.442695
    %v1672 = vpow.pop %v1671
    %v1673 = vadd.f32 %v1562, %v1564
    %v1674 = vadd.f32 %v1673, %v1566
    %v1675 = vadd.f32 %v1674, %v1568
    %v1676 = vadd.f32 %v1675, %v1570
    %v1677 = vadd.f32 %v1676, %v1572
    %v1678 = vadd.f32 %v1677, %v1574
    %v1679 = vadd.f32 %v1678, %v1576
    %v1680 = vadd.f32 %v1679, %v1578
    %v1681 = vadd.f32 %v1680, %v1580
    %v1682 = vadd.f32 %v1681, %v1582
    %v1683 = vadd.f32 %v1682, %v1584
    %v1684 = vadd.f32 %v1683, %v1586
    %v1685 = vadd.f32 %v1684, %v1588
    %v1686 = vadd.f32 %v1685, %v1590
    %v1687 = vadd.f32 %v1686, %v1592
    %v1688 = vadd.f32 %v1687, %v1594
    %v1689 = vadd.f32 %v1688, %v1596
    %v1690 = vadd.f32 %v1689, %v1598
    %v1691 = vadd.f32 %v1690, %v1600
    %v1692 = vadd.f32 %v1691, %v1602
    %v1693 = vadd.f32 %v1692, %v1604
    %v1694 = vadd.f32 %v1693, %v1606
    %v1695 = vadd.f32 %v1694, %v1608
    %v1696 = vadd.f32 %v1695, %v1610
    %v1697 = vadd.f32 %v1696, %v1612
    %v1698 = vadd.f32 %v1697, %v1614
    %v1699 = vadd.f32 %v1698, %v1616
    %v1700 = vadd.f32 %v1699, %v1618
    %v1701 = vadd.f32 %v1700, %v1620
    %v1702 = vadd.f32 %v1701, %v1622
    %v1703 = vadd.f32 %v1702, %v1624
    %v1704 = vadd.f32 %v1703, %v1626
    %v1705 = vadd.f32 %v1704, %v1628
    %v1706 = vadd.f32 %v1705, %v1630
    %v1707 = vadd.f32 %v1706, %v1632
    %v1708 = vadd.f32 %v1707, %v1634
    %v1709 = vadd.f32 %v1708, %v1636
    %v1710 = vadd.f32 %v1709, %v1638
    %v1711 = vadd.f32 %v1710, %v1640
    %v1712 = vadd.f32 %v1711, %v1642
    %v1713 = vadd.f32 %v1712, %v1644
    %v1714 = vadd.f32 %v1713, %v1646
    %v1715 = vadd.f32 %v1714, %v1648
    %v1716 = vadd.f32 %v1715, %v1650
    %v1717 = vadd.f32 %v1716, %v1652
    %v1718 = vadd.f32 %v1717, %v1654
    %v1719 = vadd.f32 %v1718, %v1656
    %v1720 = vadd.f32 %v1719, %v1658
    %v1721 = vadd.f32 %v1720, %v1660
    %v1722 = vadd.f32 %v1721, %v1662
    %v1723 = vadd.f32 %v1722, %v1664
    %v1724 = vadd.f32 %v1723, %v1666
    %v1725 = vadd.f32 %v1724, %v1668
    %v1726 = vadd.f32 %v1725, %v1670
    %v1727 = vadd.f32 %v1726, %v1672
    %1728 = vadd.xlane.f32.xlu0 %v1727
    %v1729 = vpop.xlane.xlu0 %1728
    %v1730 = vlaneseq
    %v1731 = vand.u32 %v1730, 127
    %v1732 = vadd.s32 %v1731, 128
    %v1733 = vadd.s32 %v1731, 256
    %v1734 = vadd.s32 %v1731, 384
    %v1735 = vadd.s32 %v1731, 512
    %v1736 = vadd.s32 %v1731, 640
    %v1737 = vadd.s32 %v1731, 768
    %v1738 = vadd.s32 %v1731, 896
    %v1739 = vadd.s32 %v1731, 1024
    %v1740 = vadd.s32 %v1731, 1152
    %v1741 = vadd.s32 %v1731, 1280
    %v1742 = vadd.s32 %v1731, 1408
    %v1743 = vadd.s32 %v1731, 1536
    %v1744 = vadd.s32 %v1731, 1664
    %v1745 = vadd.s32 %v1731, 1792
    %v1746 = vadd.s32 %v1731, 1920
    %v1747 = vadd.s32 %v1731, 2048
    %v1748 = vadd.s32 %v1731, 2176
    %v1749 = vadd.s32 %v1731, 2304
    %v1750 = vadd.s32 %v1731, 2432
    %v1751 = vadd.s32 %v1731, 2560
    %v1752 = vadd.s32 %v1731, 2688
    %v1753 = vadd.s32 %v1731, 2816
    %v1754 = vadd.s32 %v1731, 2944
    %v1755 = vadd.s32 %v1731, 3072
    %v1756 = vadd.s32 %v1731, 3200
    %v1757 = vadd.s32 %v1731, 3328
    %v1758 = vadd.s32 %v1731, 3456
    %v1759 = vadd.s32 %v1731, 3584
    %v1760 = vadd.s32 %v1731, 3712
    %v1761 = vadd.s32 %v1731, 3840
    %v1762 = vadd.s32 %v1731, 3968
    %v1763 = vadd.s32 %v1731, 4096
    %v1764 = vadd.s32 %v1731, 4224
    %v1765 = vadd.s32 %v1731, 4352
    %v1766 = vadd.s32 %v1731, 4480
    %v1767 = vadd.s32 %v1731, 4608
    %v1768 = vadd.s32 %v1731, 4736
    %v1769 = vadd.s32 %v1731, 4864
    %v1770 = vadd.s32 %v1731, 4992
    %v1771 = vadd.s32 %v1731, 5120
    %v1772 = vadd.s32 %v1731, 5248
    %v1773 = vadd.s32 %v1731, 5376
    %v1774 = vadd.s32 %v1731, 5504
    %v1775 = vadd.s32 %v1731, 5632
    %v1776 = vadd.s32 %v1731, 5760
    %v1777 = vadd.s32 %v1731, 5888
    %v1778 = vadd.s32 %v1731, 6016
    %v1779 = vadd.s32 %v1731, 6144
    %v1780 = vadd.s32 %v1731, 6272
    %v1781 = vadd.s32 %v1731, 6400
    %v1782 = vadd.s32 %v1731, 6528
    %v1783 = vadd.s32 %v1731, 6656
    %v1784 = vadd.s32 %v1731, 6784
    %v1785 = vadd.s32 %v1731, 6912
    %v1786 = vadd.s32 %v1731, 7040
    %vm1787 = vcmp.eq.s32.totalorder %v1731, 7081
    %vm1788 = vcmp.eq.s32.totalorder %v1732, 7081
    %vm1789 = vcmp.eq.s32.totalorder %v1733, 7081
    %vm1790 = vcmp.eq.s32.totalorder %v1734, 7081
    %vm1791 = vcmp.eq.s32.totalorder %v1735, 7081
    %vm1792 = vcmp.eq.s32.totalorder %v1736, 7081
    %vm1793 = vcmp.eq.s32.totalorder %v1737, 7081
    %vm1794 = vcmp.eq.s32.totalorder %v1738, 7081
    %vm1795 = vcmp.eq.s32.totalorder %v1739, 7081
    %vm1796 = vcmp.eq.s32.totalorder %v1740, 7081
    %vm1797 = vcmp.eq.s32.totalorder %v1741, 7081
    %vm1798 = vcmp.eq.s32.totalorder %v1742, 7081
    %vm1799 = vcmp.eq.s32.totalorder %v1743, 7081
    %vm1800 = vcmp.eq.s32.totalorder %v1744, 7081
    %vm1801 = vcmp.eq.s32.totalorder %v1745, 7081
    %vm1802 = vcmp.eq.s32.totalorder %v1746, 7081
    %vm1803 = vcmp.eq.s32.totalorder %v1747, 7081
    %vm1804 = vcmp.eq.s32.totalorder %v1748, 7081
    %vm1805 = vcmp.eq.s32.totalorder %v1749, 7081
    %vm1806 = vcmp.eq.s32.totalorder %v1750, 7081
    %vm1807 = vcmp.eq.s32.totalorder %v1751, 7081
    %vm1808 = vcmp.eq.s32.totalorder %v1752, 7081
    %vm1809 = vcmp.eq.s32.totalorder %v1753, 7081
    %vm1810 = vcmp.eq.s32.totalorder %v1754, 7081
    %vm1811 = vcmp.eq.s32.totalorder %v1755, 7081
    %vm1812 = vcmp.eq.s32.totalorder %v1756, 7081
    %vm1813 = vcmp.eq.s32.totalorder %v1757, 7081
    %vm1814 = vcmp.eq.s32.totalorder %v1758, 7081
    %vm1815 = vcmp.eq.s32.totalorder %v1759, 7081
    %vm1816 = vcmp.eq.s32.totalorder %v1760, 7081
    %vm1817 = vcmp.eq.s32.totalorder %v1761, 7081
    %vm1818 = vcmp.eq.s32.totalorder %v1762, 7081
    %vm1819 = vcmp.eq.s32.totalorder %v1763, 7081
    %vm1820 = vcmp.eq.s32.totalorder %v1764, 7081
    %vm1821 = vcmp.eq.s32.totalorder %v1765, 7081
    %vm1822 = vcmp.eq.s32.totalorder %v1766, 7081
    %vm1823 = vcmp.eq.s32.totalorder %v1767, 7081
    %vm1824 = vcmp.eq.s32.totalorder %v1768, 7081
    %vm1825 = vcmp.eq.s32.totalorder %v1769, 7081
    %vm1826 = vcmp.eq.s32.totalorder %v1770, 7081
    %vm1827 = vcmp.eq.s32.totalorder %v1771, 7081
    %vm1828 = vcmp.eq.s32.totalorder %v1772, 7081
    %vm1829 = vcmp.eq.s32.totalorder %v1773, 7081
    %vm1830 = vcmp.eq.s32.totalorder %v1774, 7081
    %vm1831 = vcmp.eq.s32.totalorder %v1775, 7081
    %vm1832 = vcmp.eq.s32.totalorder %v1776, 7081
    %vm1833 = vcmp.eq.s32.totalorder %v1777, 7081
    %vm1834 = vcmp.eq.s32.totalorder %v1778, 7081
    %vm1835 = vcmp.eq.s32.totalorder %v1779, 7081
    %vm1836 = vcmp.eq.s32.totalorder %v1780, 7081
    %vm1837 = vcmp.eq.s32.totalorder %v1781, 7081
    %vm1838 = vcmp.eq.s32.totalorder %v1782, 7081
    %vm1839 = vcmp.eq.s32.totalorder %v1783, 7081
    %vm1840 = vcmp.eq.s32.totalorder %v1784, 7081
    %vm1841 = vcmp.eq.s32.totalorder %v1785, 7081
    %vm1842 = vcmp.eq.s32.totalorder %v1786, 7081
    %v1843 = vsel %vm1787, %v1562, 0.0
    %v1844 = vsel %vm1788, %v1564, 0.0
    %v1845 = vsel %vm1789, %v1566, 0.0
    %v1846 = vsel %vm1790, %v1568, 0.0
    %v1847 = vsel %vm1791, %v1570, 0.0
    %v1848 = vsel %vm1792, %v1572, 0.0
    %v1849 = vsel %vm1793, %v1574, 0.0
    %v1850 = vsel %vm1794, %v1576, 0.0
    %v1851 = vsel %vm1795, %v1578, 0.0
    %v1852 = vsel %vm1796, %v1580, 0.0
    %v1853 = vsel %vm1797, %v1582, 0.0
    %v1854 = vsel %vm1798, %v1584, 0.0
    %v1855 = vsel %vm1799, %v1586, 0.0
    %v1856 = vsel %vm1800, %v1588, 0.0
    %v1857 = vsel %vm1801, %v1590, 0.0
    %v1858 = vsel %vm1802, %v1592, 0.0
    %v1859 = vsel %vm1803, %v1594, 0.0
    %v1860 = vsel %vm1804, %v1596, 0.0
    %v1861 = vsel %vm1805, %v1598, 0.0
    %v1862 = vsel %vm1806, %v1600, 0.0
    %v1863 = vsel %vm1807, %v1602, 0.0
    %v1864 = vsel %vm1808, %v1604, 0.0
    %v1865 = vsel %vm1809, %v1606, 0.0
    %v1866 = vsel %vm1810, %v1608, 0.0
    %v1867 = vsel %vm1811, %v1610, 0.0
    %v1868 = vsel %vm1812, %v1612, 0.0
    %v1869 = vsel %vm1813, %v1614, 0.0
    %v1870 = vsel %vm1814, %v1616, 0.0
    %v1871 = vsel %vm1815, %v1618, 0.0
    %v1872 = vsel %vm1816, %v1620, 0.0
    %v1873 = vsel %vm1817, %v1622, 0.0
    %v1874 = vsel %vm1818, %v1624, 0.0
    %v1875 = vsel %vm1819, %v1626, 0.0
    %v1876 = vsel %vm1820, %v1628, 0.0
    %v1877 = vsel %vm1821, %v1630, 0.0
    %v1878 = vsel %vm1822, %v1632, 0.0
    %v1879 = vsel %vm1823, %v1634, 0.0
    %v1880 = vsel %vm1824, %v1636, 0.0
    %v1881 = vsel %vm1825, %v1638, 0.0
    %v1882 = vsel %vm1826, %v1640, 0.0
    %v1883 = vsel %vm1827, %v1642, 0.0
    %v1884 = vsel %vm1828, %v1644, 0.0
    %v1885 = vsel %vm1829, %v1646, 0.0
    %v1886 = vsel %vm1830, %v1648, 0.0
    %v1887 = vsel %vm1831, %v1650, 0.0
    %v1888 = vsel %vm1832, %v1652, 0.0
    %v1889 = vsel %vm1833, %v1654, 0.0
    %v1890 = vsel %vm1834, %v1656, 0.0
    %v1891 = vsel %vm1835, %v1658, 0.0
    %v1892 = vsel %vm1836, %v1660, 0.0
    %v1893 = vsel %vm1837, %v1662, 0.0
    %v1894 = vsel %vm1838, %v1664, 0.0
    %v1895 = vsel %vm1839, %v1666, 0.0
    %v1896 = vsel %vm1840, %v1668, 0.0
    %v1897 = vsel %vm1841, %v1670, 0.0
    %v1898 = vsel %vm1842, %v1672, 0.0
    %v1899 = vadd.f32 %v1843, %v1844
    %v1900 = vadd.f32 %v1899, %v1845
    %v1901 = vadd.f32 %v1900, %v1846
    %v1902 = vadd.f32 %v1901, %v1847
    %v1903 = vadd.f32 %v1902, %v1848
    %v1904 = vadd.f32 %v1903, %v1849
    %v1905 = vadd.f32 %v1904, %v1850
    %v1906 = vadd.f32 %v1905, %v1851
    %v1907 = vadd.f32 %v1906, %v1852
    %v1908 = vadd.f32 %v1907, %v1853
    %v1909 = vadd.f32 %v1908, %v1854
    %v1910 = vadd.f32 %v1909, %v1855
    %v1911 = vadd.f32 %v1910, %v1856
    %v1912 = vadd.f32 %v1911, %v1857
    %v1913 = vadd.f32 %v1912, %v1858
    %v1914 = vadd.f32 %v1913, %v1859
    %v1915 = vadd.f32 %v1914, %v1860
    %v1916 = vadd.f32 %v1915, %v1861
    %v1917 = vadd.f32 %v1916, %v1862
    %v1918 = vadd.f32 %v1917, %v1863
    %v1919 = vadd.f32 %v1918, %v1864
    %v1920 = vadd.f32 %v1919, %v1865
    %v1921 = vadd.f32 %v1920, %v1866
    %v1922 = vadd.f32 %v1921, %v1867
    %v1923 = vadd.f32 %v1922, %v1868
    %v1924 = vadd.f32 %v1923, %v1869
    %v1925 = vadd.f32 %v1924, %v1870
    %v1926 = vadd.f32 %v1925, %v1871
    %v1927 = vadd.f32 %v1926, %v1872
    %v1928 = vadd.f32 %v1927, %v1873
    %v1929 = vadd.f32 %v1928, %v1874
    %v1930 = vadd.f32 %v1929, %v1875
    %v1931 = vadd.f32 %v1930, %v1876
    %v1932 = vadd.f32 %v1931, %v1877
    %v1933 = vadd.f32 %v1932, %v1878
    %v1934 = vadd.f32 %v1933, %v1879
    %v1935 = vadd.f32 %v1934, %v1880
    %v1936 = vadd.f32 %v1935, %v1881
    %v1937 = vadd.f32 %v1936, %v1882
    %v1938 = vadd.f32 %v1937, %v1883
    %v1939 = vadd.f32 %v1938, %v1884
    %v1940 = vadd.f32 %v1939, %v1885
    %v1941 = vadd.f32 %v1940, %v1886
    %v1942 = vadd.f32 %v1941, %v1887
    %v1943 = vadd.f32 %v1942, %v1888
    %v1944 = vadd.f32 %v1943, %v1889
    %v1945 = vadd.f32 %v1944, %v1890
    %v1946 = vadd.f32 %v1945, %v1891
    %v1947 = vadd.f32 %v1946, %v1892
    %v1948 = vadd.f32 %v1947, %v1893
    %v1949 = vadd.f32 %v1948, %v1894
    %v1950 = vadd.f32 %v1949, %v1895
    %v1951 = vadd.f32 %v1950, %v1896
    %v1952 = vadd.f32 %v1951, %v1897
    %v1953 = vadd.f32 %v1952, %v1898
    %1954 = vadd.xlane.f32.xlu0 %v1953
    %v1955 = vpop.xlane.xlu0 %1954
    %v1956 = vrcp.pop %v1729
    %v1957 = vmul.f32 %v1729, %v1956
    %v1958 = vsub.f32 1.0, %v1957
    %v1959 = vmul.f32 %v1956, %v1958
    %v1960 = vadd.f32 %v1956, %v1959
    %vm1961 = vweird.f32 %v1729
    %vm1962 = vweird.f32 %v1956
    %vm1963 = vmor %vm1961, %vm1962
    %v1964 = vsel %vm1963, %v1956, %v1960
    %v1965 = vand.u32 2147483647, %v1729
    %vm1966 = vcmp.eq.f32.partialorder %v1965, 8.507059e+37
    %v1967 = vand.u32 %v1729, 2147483648
    %v1968 = vor.u32 1.1754944e-38, %v1967
    %v1969 = vsel %vm1966, %v1968, %v1964
    %v1970 = vmul.f32 %v1955, %v1969
    %1971 = vst [vmem:[#allocation7] sm:$0xff] %v1970
    // Predicated region
    $region18: #{tpu_custom_call.1} parent=1 // pred_check
      _
    $region19: #{tpu_custom_call.1} parent=1 // pred_check_branch
      %1973 = sbr.rel (0) target = $region21
    $region20: #{tpu_custom_call.1} parent=1 // pred_region
      %1975 = vsyncadd [#allocation4], 0
      %s1977 = sshll.u32 [#allocation7], 4
      %s1978 = int_to_ptr.vmem [resolvable:$true] %s1977
      %s1979 = sshll.u32 %s2, 4
      %s1980 = int_to_ptr.hbm [resolvable:$true] %s1979
      %1982 = dma.vmem_to_hbm [thread:$0]  %s1978, 128, %s1980, [#allocation4]
    $region21: #{tpu_custom_call.1} parent=1 // pred_fallthru
      _
    // Predicated region
    $region22: #{tpu_custom_call.1} parent=1 // pred_check
      _
    $region23: #{tpu_custom_call.1} parent=1 // pred_check_branch
      %1984 = sbr.rel (0) target = $region25
    $region24: #{tpu_custom_call.1} parent=1 // pred_region
      %1986 = dma.done [#allocation4], 128
    $region25: #{tpu_custom_call.1} parent=1 // pred_fallthru
      _
    %1987 = vsyncpa [#allocation3], 1
    %1988 = vsyncpa [#allocation6], 1
    %1989 = vsyncpa [#allocation4], 1

</llo_original>
